<compile_context>
chip_gen: v5e
topology: v5e:2x2
jax: 0.10.0
libtpu: 0.0.40
codegen_flags: <defaults>
</compile_context>

<pallas_src>
import jax
import jax.numpy as jnp
from jax import lax
from jax.experimental import pallas as pl
from jax.experimental.pallas import tpu as pltpu

LN_EPS = 1e-5  # torch.nn.LayerNorm default eps


def _ln_silu(x, gamma, beta):
    # LayerNorm (biased variance, one-pass stats) -> SiLU, all in f32.
    mean = jnp.mean(x, axis=-1, keepdims=True)
    mean_sq = jnp.mean(x * x, axis=-1, keepdims=True)
    var = mean_sq - mean * mean
    y = (x - mean) * lax.rsqrt(var + LN_EPS)
    y = y * gamma + beta
    return y * jax.nn.sigmoid(y)  # SiLU


def continue_predictor_kernel(h_ref, z_ref, w1h_ref, w1z_ref, g1_ref, b1_ref,
                              w2_ref, g2_ref, b2_ref, wo_ref, out_ref):
    # bf16 operands for the MXU, f32 accumulation.
    h_in = h_ref[...].astype(jnp.bfloat16)
    z_in = z_ref[...].astype(jnp.bfloat16)

    # Fused concat: cat([h, z]) @ W1 == h @ W1h + z @ W1z.
    a = (jnp.dot(h_in, w1h_ref[...], preferred_element_type=jnp.float32)
         + jnp.dot(z_in, w1z_ref[...], preferred_element_type=jnp.float32))
    a = _ln_silu(a, g1_ref[...], b1_ref[...])                       # f32 (tb, mlp)

    a = jnp.dot(a.astype(jnp.bfloat16), w2_ref[...],
                preferred_element_type=jnp.float32)
    a = _ln_silu(a, g2_ref[...], b2_ref[...])                       # f32 (tb, mlp)

    # Linear(mlp, 1, bias=False): weighted lane reduce (avoids an N=1 MXU matmul).
    logit = jnp.sum(a * wo_ref[...], axis=-1, keepdims=True)        # (tb, 1)
    out_ref[...] = logit.astype(out_ref.dtype)


def _choose_tb(B, tb):
    if tb is None:
        tb = min(512, B)
        # keep at least 2 parallel grid steps so v7x's second TensorCore gets work
        if B // tb < 2 and B >= 16:
            tb = B // 2
    assert B % tb == 0, f"batch {B} must be divisible by tile {tb}"
    assert tb % 8 == 0, f"batch tile {tb} must be a multiple of 8"
    return tb


def continue_predictor_logits(h, z, params, *, tb=None):
    """Returns the Bernoulli logits, shape (B, 1), f32."""
    B, H = h.shape
    z_flat = z.reshape(B, -1)          # contiguous flatten, no copy
    ZC = z_flat.shape[-1]
    mlp = params["w1h"].shape[-1]
    tb = _choose_tb(B, tb)

    full = lambda i: (0, 0)            # weights resident across every grid step
    return pl.pallas_call(
        continue_predictor_kernel,
        out_shape=jax.ShapeDtypeStruct((B, 1), jnp.float32),
        grid_spec=pltpu.PrefetchScalarGridSpec(
            num_scalar_prefetch=0,
            grid=(B // tb,),
            in_specs=[
                pl.BlockSpec((tb, H), lambda i: (i, 0)),    # h tile
                pl.BlockSpec((tb, ZC), lambda i: (i, 0)),   # z_flat tile
                pl.BlockSpec((H, mlp), full),               # W1h (bf16)
                pl.BlockSpec((ZC, mlp), full),              # W1z (bf16)
                pl.BlockSpec((1, mlp), full),               # ln1 gamma (f32)
                pl.BlockSpec((1, mlp), full),               # ln1 beta  (f32)
                pl.BlockSpec((mlp, mlp), full),             # W2 (bf16)
                pl.BlockSpec((1, mlp), full),               # ln2 gamma (f32)
                pl.BlockSpec((1, mlp), full),               # ln2 beta  (f32)
                pl.BlockSpec((1, mlp), full),               # W_out row (f32)
            ],
            out_specs=pl.BlockSpec((tb, 1), lambda i: (i, 0)),
        ),
        compiler_params=pltpu.CompilerParams(
            dimension_semantics=("parallel",)),
    )(h, z_flat, params["w1h"], params["w1z"], params["g1"], params["b1"],
      params["w2"], params["g2"], params["b2"], params["wo"])


def _ref_logits(h, z, p):
    # pure-JAX reference of the same math (same bf16 matmul operands / f32 LN).
    x = jnp.concatenate([h, z.reshape(h.shape[0], -1)], axis=-1)
    w1 = jnp.concatenate([p["w1h"], p["w1z"]], axis=0)
    a = x
    for w, g, b in ((w1, p["g1"], p["b1"]), (p["w2"], p["g2"], p["b2"])):
        a = jnp.dot(a.astype(jnp.bfloat16), w, preferred_element_type=jnp.float32)
        m = a.mean(-1, keepdims=True)
        v = ((a - m) ** 2).mean(-1, keepdims=True)
        a = (a - m) / jnp.sqrt(v + LN_EPS) * g + b
        a = a * jax.nn.sigmoid(a)
    return jnp.sum(a * p["wo"], axis=-1, keepdims=True)


if __name__ == "__main__":
    # Small-shape instance of ContinuePredictor(h_size=128, z_size=8, z_cls=16,
    # mlp_size=128, mlp_layers=2); output is a single Bernoulli logit per row.
    B, H, Z, C, MLP = 256, 128, 8, 16, 128
    ZC = Z * C

    key = jax.random.PRNGKey(0)
    k = jax.random.split(key, 8)
    h = jax.random.normal(k[0], (B, H), jnp.float32)
    z = jax.random.normal(k[1], (B, Z, C), jnp.float32)

    def trunc_normal(kk, shape, fan_in, dtype):
        # deterministic stand-in for init_weights (truncated-normal, 1/sqrt(fan_in))
        w = (1.0 / jnp.sqrt(fan_in)) * jax.random.truncated_normal(
            kk, -2.0, 2.0, shape, jnp.float32)
        return w.astype(dtype)

    params = {
        # matmul weights stored bf16 (MXU-native on v6e/v7x, halves HBM/VMEM bytes)
        "w1h": trunc_normal(k[2], (H, MLP), H + ZC, jnp.bfloat16),
        "w1z": trunc_normal(k[3], (ZC, MLP), H + ZC, jnp.bfloat16),
        "w2":  trunc_normal(k[4], (MLP, MLP), MLP, jnp.bfloat16),
        # LayerNorm affine params stay f32 (LN/SiLU math is f32)
        "g1": jnp.ones((1, MLP), jnp.float32),
        "b1": jnp.zeros((1, MLP), jnp.float32),
        "g2": jnp.ones((1, MLP), jnp.float32),
        "b2": jnp.zeros((1, MLP), jnp.float32),
        # final Linear(mlp, 1, bias=False) stored as a single f32 row (1, MLP)
        "wo": trunc_normal(k[5], (1, MLP), MLP, jnp.float32),
    }

    logits = jax.block_until_ready(continue_predictor_logits(h, z, params))
    assert logits.shape == (B, 1)
    ref = _ref_logits(h, z, params)
    assert jnp.allclose(logits, ref, atol=2e-2, rtol=2e-2), (
        float(jnp.max(jnp.abs(logits - ref))))

    # also exercise the zero-output-weight case (logits exactly 0 -> p = 0.5)
    params_z = dict(params, wo=jnp.zeros((1, MLP), jnp.float32))
    logits_z = jax.block_until_ready(continue_predictor_logits(h, z, params_z))
    assert jnp.allclose(logits_z, 0.0)

    print("KERNEL_OK")
</pallas_src>

<mosaic_0001>
module attributes {stable_mosaic.version = 11 : i64} {
  func.func @continue_predictor_kernel(%arg0: i32, %arg1: memref<128x128xf32, #tpu.memory_space<vmem>>, %arg2: memref<128x128xf32, #tpu.memory_space<vmem>>, %arg3: memref<128x128xbf16, #tpu.memory_space<vmem>>, %arg4: memref<128x128xbf16, #tpu.memory_space<vmem>>, %arg5: memref<1x128xf32, #tpu.memory_space<vmem>>, %arg6: memref<1x128xf32, #tpu.memory_space<vmem>>, %arg7: memref<128x128xbf16, #tpu.memory_space<vmem>>, %arg8: memref<1x128xf32, #tpu.memory_space<vmem>>, %arg9: memref<1x128xf32, #tpu.memory_space<vmem>>, %arg10: memref<1x128xf32, #tpu.memory_space<vmem>>, %arg11: memref<128x1xf32, #tpu.memory_space<vmem>>) attributes {dimension_semantics = [#tpu.dimension_semantics<parallel>], iteration_bounds = array<i64: 2>, scalar_prefetch = 0 : i64, scratch_operands = 0 : i64, tpu.core_type = #tpu.core_type<tc>, window_params = [{transform_indices = @transform_0, window_bounds = array<i64: 128, 128>}, {transform_indices = @transform_1, window_bounds = array<i64: 128, 128>}, {pipeline_mode = #tpu.pipeline_mode<synchronous>, transform_indices = @transform_2, window_bounds = array<i64: 128, 128>}, {pipeline_mode = #tpu.pipeline_mode<synchronous>, transform_indices = @transform_3, window_bounds = array<i64: 128, 128>}, {pipeline_mode = #tpu.pipeline_mode<synchronous>, transform_indices = @transform_4, window_bounds = array<i64: 1, 128>}, {pipeline_mode = #tpu.pipeline_mode<synchronous>, transform_indices = @transform_5, window_bounds = array<i64: 1, 128>}, {pipeline_mode = #tpu.pipeline_mode<synchronous>, transform_indices = @transform_6, window_bounds = array<i64: 128, 128>}, {pipeline_mode = #tpu.pipeline_mode<synchronous>, transform_indices = @transform_7, window_bounds = array<i64: 1, 128>}, {pipeline_mode = #tpu.pipeline_mode<synchronous>, transform_indices = @transform_8, window_bounds = array<i64: 1, 128>}, {pipeline_mode = #tpu.pipeline_mode<synchronous>, transform_indices = @transform_9, window_bounds = array<i64: 1, 128>}, {transform_indices = @transform_10, window_bounds = array<i64: 128, 1>}]} {
    %c0 = arith.constant 0 : index
    %c0_0 = arith.constant 0 : index
    %0 = vector.load %arg1[%c0, %c0_0] : memref<128x128xf32, #tpu.memory_space<vmem>>, vector<128x128xf32>
    %1 = arith.truncf %0 : vector<128x128xf32> to vector<128x128xbf16>
    %c0_1 = arith.constant 0 : index
    %c0_2 = arith.constant 0 : index
    %2 = vector.load %arg2[%c0_1, %c0_2] : memref<128x128xf32, #tpu.memory_space<vmem>>, vector<128x128xf32>
    %3 = arith.truncf %2 : vector<128x128xf32> to vector<128x128xbf16>
    %c0_3 = arith.constant 0 : index
    %c0_4 = arith.constant 0 : index
    %4 = vector.load %arg3[%c0_3, %c0_4] : memref<128x128xbf16, #tpu.memory_space<vmem>>, vector<128x128xbf16>
    %cst = arith.constant dense<0.000000e+00> : vector<128x128xf32>
    %5 = tpu.matmul %1, %4, %cst {dimension_numbers = #tpu.dot_dimension_numbers<[1], [0], [0], [1], [0, 0, 1, 1], [], []>} : vector<128x128xbf16>, vector<128x128xbf16>, vector<128x128xf32> -> vector<128x128xf32>
    %c0_5 = arith.constant 0 : index
    %c0_6 = arith.constant 0 : index
    %6 = vector.load %arg4[%c0_5, %c0_6] : memref<128x128xbf16, #tpu.memory_space<vmem>>, vector<128x128xbf16>
    %cst_7 = arith.constant dense<0.000000e+00> : vector<128x128xf32>
    %7 = tpu.matmul %3, %6, %cst_7 {dimension_numbers = #tpu.dot_dimension_numbers<[1], [0], [0], [1], [0, 0, 1, 1], [], []>} : vector<128x128xbf16>, vector<128x128xbf16>, vector<128x128xf32> -> vector<128x128xf32>
    %8 = arith.addf %5, %7 : vector<128x128xf32>
    %c0_8 = arith.constant 0 : index
    %c0_9 = arith.constant 0 : index
    %9 = vector.load %arg5[%c0_8, %c0_9] : memref<1x128xf32, #tpu.memory_space<vmem>>, vector<1x128xf32>
    %c0_10 = arith.constant 0 : index
    %c0_11 = arith.constant 0 : index
    %10 = vector.load %arg6[%c0_10, %c0_11] : memref<1x128xf32, #tpu.memory_space<vmem>>, vector<1x128xf32>
    %cst_12 = arith.constant dense<0.000000e+00> : vector<128xf32>
    %11 = vector.multi_reduction <add>, %8, %cst_12 [1] : vector<128x128xf32> to vector<128xf32>
    %12 = vector.shape_cast %11 : vector<128xf32> to vector<128x1xf32>
    %cst_13 = arith.constant 1.280000e+02 : f32
    %13 = vector.broadcast %cst_13 : f32 to vector<128x1xf32>
    %14 = arith.divf %12, %13 : vector<128x1xf32>
    %15 = arith.mulf %8, %8 : vector<128x128xf32>
    %cst_14 = arith.constant dense<0.000000e+00> : vector<128xf32>
    %16 = vector.multi_reduction <add>, %15, %cst_14 [1] : vector<128x128xf32> to vector<128xf32>
    %17 = vector.shape_cast %16 : vector<128xf32> to vector<128x1xf32>
    %cst_15 = arith.constant 1.280000e+02 : f32
    %18 = vector.broadcast %cst_15 : f32 to vector<128x1xf32>
    %19 = arith.divf %17, %18 : vector<128x1xf32>
    %20 = arith.mulf %14, %14 : vector<128x1xf32>
    %21 = arith.subf %19, %20 : vector<128x1xf32>
    %22 = vector.broadcast %14 : vector<128x1xf32> to vector<128x128xf32>
    %23 = arith.subf %8, %22 : vector<128x128xf32>
    %cst_16 = arith.constant 9.99999974E-6 : f32
    %24 = vector.broadcast %cst_16 : f32 to vector<128x1xf32>
    %25 = arith.addf %21, %24 : vector<128x1xf32>
    %26 = math.rsqrt %25 : vector<128x1xf32>
    %27 = vector.broadcast %26 : vector<128x1xf32> to vector<128x128xf32>
    %28 = arith.mulf %23, %27 : vector<128x128xf32>
    %29 = vector.broadcast %9 : vector<1x128xf32> to vector<128x128xf32>
    %30 = arith.mulf %28, %29 : vector<128x128xf32>
    %31 = vector.broadcast %10 : vector<1x128xf32> to vector<128x128xf32>
    %32 = arith.addf %30, %31 : vector<128x128xf32>
    %33 = arith.negf %32 : vector<128x128xf32>
    %34 = math.exp %33 : vector<128x128xf32>
    %cst_17 = arith.constant 1.000000e+00 : f32
    %35 = vector.broadcast %cst_17 : f32 to vector<128x128xf32>
    %36 = arith.addf %35, %34 : vector<128x128xf32>
    %37 = arith.divf %35, %36 : vector<128x128xf32>
    %38 = arith.mulf %32, %37 : vector<128x128xf32>
    %39 = arith.truncf %38 : vector<128x128xf32> to vector<128x128xbf16>
    %c0_18 = arith.constant 0 : index
    %c0_19 = arith.constant 0 : index
    %40 = vector.load %arg7[%c0_18, %c0_19] : memref<128x128xbf16, #tpu.memory_space<vmem>>, vector<128x128xbf16>
    %cst_20 = arith.constant dense<0.000000e+00> : vector<128x128xf32>
    %41 = tpu.matmul %39, %40, %cst_20 {dimension_numbers = #tpu.dot_dimension_numbers<[1], [0], [0], [1], [0, 0, 1, 1], [], []>} : vector<128x128xbf16>, vector<128x128xbf16>, vector<128x128xf32> -> vector<128x128xf32>
    %c0_21 = arith.constant 0 : index
    %c0_22 = arith.constant 0 : index
    %42 = vector.load %arg8[%c0_21, %c0_22] : memref<1x128xf32, #tpu.memory_space<vmem>>, vector<1x128xf32>
    %c0_23 = arith.constant 0 : index
    %c0_24 = arith.constant 0 : index
    %43 = vector.load %arg9[%c0_23, %c0_24] : memref<1x128xf32, #tpu.memory_space<vmem>>, vector<1x128xf32>
    %cst_25 = arith.constant dense<0.000000e+00> : vector<128xf32>
    %44 = vector.multi_reduction <add>, %41, %cst_25 [1] : vector<128x128xf32> to vector<128xf32>
    %45 = vector.shape_cast %44 : vector<128xf32> to vector<128x1xf32>
    %cst_26 = arith.constant 1.280000e+02 : f32
    %46 = vector.broadcast %cst_26 : f32 to vector<128x1xf32>
    %47 = arith.divf %45, %46 : vector<128x1xf32>
    %48 = arith.mulf %41, %41 : vector<128x128xf32>
    %cst_27 = arith.constant dense<0.000000e+00> : vector<128xf32>
    %49 = vector.multi_reduction <add>, %48, %cst_27 [1] : vector<128x128xf32> to vector<128xf32>
    %50 = vector.shape_cast %49 : vector<128xf32> to vector<128x1xf32>
    %cst_28 = arith.constant 1.280000e+02 : f32
    %51 = vector.broadcast %cst_28 : f32 to vector<128x1xf32>
    %52 = arith.divf %50, %51 : vector<128x1xf32>
    %53 = arith.mulf %47, %47 : vector<128x1xf32>
    %54 = arith.subf %52, %53 : vector<128x1xf32>
    %55 = vector.broadcast %47 : vector<128x1xf32> to vector<128x128xf32>
    %56 = arith.subf %41, %55 : vector<128x128xf32>
    %cst_29 = arith.constant 9.99999974E-6 : f32
    %57 = vector.broadcast %cst_29 : f32 to vector<128x1xf32>
    %58 = arith.addf %54, %57 : vector<128x1xf32>
    %59 = math.rsqrt %58 : vector<128x1xf32>
    %60 = vector.broadcast %59 : vector<128x1xf32> to vector<128x128xf32>
    %61 = arith.mulf %56, %60 : vector<128x128xf32>
    %62 = vector.broadcast %42 : vector<1x128xf32> to vector<128x128xf32>
    %63 = arith.mulf %61, %62 : vector<128x128xf32>
    %64 = vector.broadcast %43 : vector<1x128xf32> to vector<128x128xf32>
    %65 = arith.addf %63, %64 : vector<128x128xf32>
    %66 = arith.negf %65 : vector<128x128xf32>
    %67 = math.exp %66 : vector<128x128xf32>
    %cst_30 = arith.constant 1.000000e+00 : f32
    %68 = vector.broadcast %cst_30 : f32 to vector<128x128xf32>
    %69 = arith.addf %68, %67 : vector<128x128xf32>
    %70 = arith.divf %68, %69 : vector<128x128xf32>
    %71 = arith.mulf %65, %70 : vector<128x128xf32>
    %c0_31 = arith.constant 0 : index
    %c0_32 = arith.constant 0 : index
    %72 = vector.load %arg10[%c0_31, %c0_32] : memref<1x128xf32, #tpu.memory_space<vmem>>, vector<1x128xf32>
    %73 = vector.broadcast %72 : vector<1x128xf32> to vector<128x128xf32>
    %74 = arith.mulf %71, %73 : vector<128x128xf32>
    %cst_33 = arith.constant dense<0.000000e+00> : vector<128xf32>
    %75 = vector.multi_reduction <add>, %74, %cst_33 [1] : vector<128x128xf32> to vector<128xf32>
    %76 = vector.shape_cast %75 : vector<128xf32> to vector<128x1xf32>
    %c0_34 = arith.constant 0 : index
    %c0_35 = arith.constant 0 : index
    %77 = vector.load %arg11[%c0_34, %c0_35] : memref<128x1xf32, #tpu.memory_space<vmem>>, vector<128x1xf32>
    tpu.vector_store %arg11[%c0_34, %c0_35], %76 {strides = array<i32>} : memref<128x1xf32, #tpu.memory_space<vmem>>, vector<128x1xf32>,
    return
  }
  func.func @transform_0(%arg0: i32) -> (i32, i32) {
    %c0_i32 = arith.constant 0 : i32
    %c0_i32_0 = arith.constant 0 : i32
    return %arg0, %c0_i32 : i32, i32
  }
  func.func @transform_1(%arg0: i32) -> (i32, i32) {
    %c0_i32 = arith.constant 0 : i32
    %c0_i32_0 = arith.constant 0 : i32
    return %arg0, %c0_i32 : i32, i32
  }
  func.func @transform_2(%arg0: i32) -> (i32, i32) {
    %c0_i32 = arith.constant 0 : i32
    %c0_i32_0 = arith.constant 0 : i32
    %c0_i32_1 = arith.constant 0 : i32
    return %c0_i32, %c0_i32_0 : i32, i32
  }
  func.func @transform_3(%arg0: i32) -> (i32, i32) {
    %c0_i32 = arith.constant 0 : i32
    %c0_i32_0 = arith.constant 0 : i32
    %c0_i32_1 = arith.constant 0 : i32
    return %c0_i32, %c0_i32_0 : i32, i32
  }
  func.func @transform_4(%arg0: i32) -> (i32, i32) {
    %c0_i32 = arith.constant 0 : i32
    %c0_i32_0 = arith.constant 0 : i32
    %c0_i32_1 = arith.constant 0 : i32
    return %c0_i32, %c0_i32_0 : i32, i32
  }
  func.func @transform_5(%arg0: i32) -> (i32, i32) {
    %c0_i32 = arith.constant 0 : i32
    %c0_i32_0 = arith.constant 0 : i32
    %c0_i32_1 = arith.constant 0 : i32
    return %c0_i32, %c0_i32_0 : i32, i32
  }
  func.func @transform_6(%arg0: i32) -> (i32, i32) {
    %c0_i32 = arith.constant 0 : i32
    %c0_i32_0 = arith.constant 0 : i32
    %c0_i32_1 = arith.constant 0 : i32
    return %c0_i32, %c0_i32_0 : i32, i32
  }
  func.func @transform_7(%arg0: i32) -> (i32, i32) {
    %c0_i32 = arith.constant 0 : i32
    %c0_i32_0 = arith.constant 0 : i32
    %c0_i32_1 = arith.constant 0 : i32
    return %c0_i32, %c0_i32_0 : i32, i32
  }
  func.func @transform_8(%arg0: i32) -> (i32, i32) {
    %c0_i32 = arith.constant 0 : i32
    %c0_i32_0 = arith.constant 0 : i32
    %c0_i32_1 = arith.constant 0 : i32
    return %c0_i32, %c0_i32_0 : i32, i32
  }
  func.func @transform_9(%arg0: i32) -> (i32, i32) {
    %c0_i32 = arith.constant 0 : i32
    %c0_i32_0 = arith.constant 0 : i32
    %c0_i32_1 = arith.constant 0 : i32
    return %c0_i32, %c0_i32_0 : i32, i32
  }
  func.func @transform_10(%arg0: i32) -> (i32, i32) {
    %c0_i32 = arith.constant 0 : i32
    %c0_i32_0 = arith.constant 0 : i32
    return %arg0, %c0_i32 : i32, i32
  }
}

</mosaic_0001>

<llo_original>
// kernel: tpu_custom_call.1
$region0: #{tpu_custom_call.1}
  #allocation0 [shape = 'u32[]', space=smem, size = 0x4, offset = 0x4, fixed_abs, tag = 'smem constant byte address 0x4 - core index']
  #allocation1 [shape = 'u32[72,128]{1,0:T(1,128)}', space=vmem, size = 0x9000, scoped, tag = 'internal scratch']
  %s0 = inlined_call_operand.hbm [shape: f32[256,128], index: 0, kind: input, shape index: {}]
  %s1 = inlined_call_operand.hbm [shape: f32[256,128], index: 1, kind: input, shape index: {}]
  %s2 = inlined_call_operand.hbm [shape: bf16[128,128], index: 2, kind: input, shape index: {}]
  %s3 = inlined_call_operand.hbm [shape: bf16[128,128], index: 3, kind: input, shape index: {}]
  %s4 = inlined_call_operand.vmem [shape: f32[1,128], index: 4, kind: input, shape index: {}]
  %s5 = inlined_call_operand.vmem [shape: f32[1,128], index: 5, kind: input, shape index: {}]
  %s6 = inlined_call_operand.hbm [shape: bf16[128,128], index: 6, kind: input, shape index: {}]
  %s7 = inlined_call_operand.vmem [shape: f32[1,128], index: 7, kind: input, shape index: {}]
  %s8 = inlined_call_operand.vmem [shape: f32[1,128], index: 8, kind: input, shape index: {}]
  %s9 = inlined_call_operand.vmem [shape: f32[1,128], index: 9, kind: input, shape index: {}]
  %s10 = inlined_call_operand.vmem [shape: f32[256,1], index: 10, kind: output, shape index: {}]
  %s11 = sld [smem:[#allocation0]]
  $region93: #{tpu_custom_call.1} parent=0
    _
  %s13 = ssub.s32 1, %s11
  %s14 = scalar_select 0, %s13, %s11
  $region1: #{tpu_custom_call.1} parent=0
    #allocation2 [shape = 'u8[131072]{0}', space=vmem, size = 0x20000, scoped, tag = 'input window, operand 0']
    #allocation3 [shape = 's32[2]{0}', space=sflag, size = 0x8, scoped, tag = 'scoped memory for tpu_custom_call.1']
    #allocation4 [shape = 'u8[131072]{0}', space=vmem, size = 0x20000, scoped, tag = 'input window, operand 1']
    #allocation5 [shape = 's32[2]{0}', space=sflag, size = 0x8, scoped, tag = 'scoped memory for tpu_custom_call.1']
    #allocation6 [shape = 'u8[32768]{0}', space=vmem, size = 0x8000, scoped, tag = 'input window, operand 2, single buffered']
    #allocation7 [shape = 'u8[32768]{0}', space=vmem, size = 0x8000, scoped, tag = 'input window, operand 3, single buffered']
    #allocation8 [shape = 's32[1]{0}', space=sflag, size = 0x4, scoped, tag = 'scoped memory for tpu_custom_call.1']
    #allocation9 [shape = 'u8[32768]{0}', space=vmem, size = 0x8000, scoped, tag = 'input window, operand 6, single buffered']
    %15 = vsyncpa [#allocation3], 0
    %s16 = scalar_lea.sflag [#allocation3], 1
    %17 = vsyncpa %s16, 0
    %18 = vsyncpa [#allocation5], 0
    %s19 = scalar_lea.sflag [#allocation5], 1
    %20 = vsyncpa %s19, 0
    %21 = vsyncpa [#allocation8], 0
    loop: start=0, step=1, limit=4
    $region2: #{tpu_custom_call.1} parent=1 // loop_pre_header
      _
    $region3: #{tpu_custom_call.1} parent=1 // loop_header
      %s23 = sphi 0, %s27
      %p24 = scmp.ge.s32.totalorder %s23, 4
      %s33 = sphi 0, %s35
      %s36 = sphi 0, %s33
      %s37 = sphi 0, %s36
      %s53 = sphi 0, %s37
      %s59 = sphi 0, %s61
      %s62 = sphi 0, %s59
      %s63 = sphi 0, %s62
      %s79 = sphi 0, %s63
      %s83 = sphi 0, %s83
      %s85 = sphi 0, %s83
      %s86 = sphi 0, %s85
      %s100 = sphi 0, %s86
      %s104 = sphi 0, %s104
      %s106 = sphi 0, %s104
      %s107 = sphi 0, %s106
      %s121 = sphi 0, %s107
      %s125 = sphi 0, %s125
      %s127 = sphi 0, %s125
      %s128 = sphi 0, %s127
      %s142 = sphi 0, %s128
      %s146 = sphi 0, %s146
      %s148 = sphi 0, %s146
      %s149 = sphi 0, %s148
      %s163 = sphi 0, %s149
      %s167 = sphi 0, %s167
      %s169 = sphi 0, %s167
      %s170 = sphi 0, %s169
      %s184 = sphi 0, %s170
      %s188 = sphi 0, %s188
      %s190 = sphi 0, %s188
      %s191 = sphi 0, %s190
      %s205 = sphi 0, %s191
      %s209 = sphi 0, %s209
      %s211 = sphi 0, %s209
      %s212 = sphi 0, %s211
      %s226 = sphi 0, %s212
      %s230 = sphi 0, %s230
      %s232 = sphi 0, %s230
      %s233 = sphi 0, %s232
      %s247 = sphi 0, %s233
      %s253 = sphi 0, %s255
      %s256 = sphi 0, %s253
      %s257 = sphi 0, %s256
      %s273 = sphi 0, %s257
    $region4: #{tpu_custom_call.1} parent=1 // loop_header_branch
      %26 = sbr.rel (%p24) target = $region8
    $region5: #{tpu_custom_call.1} parent=1 // loop_body
      %s28 = ssub.s32 %s23, 1
      %s29 = ssub.s32 %s23, 2
      %s30 = sadd.s32 %s23, 1
      %s31 = ssub.s32 %s23, %s30
      %p32 = scmp.eq.s32.totalorder %s31, 0
      %s34 = sadd.s32 %s33, 1
      %s35 = scalar_select %p32, %s33, %s34
      %p38 = pneg %p32
      %p39 = scmp.eq.s32.totalorder %s23, 1
      %p40 = por %p38, %p39
      %p41 = scmp.ne.s32.totalorder %s33, %s36
      %p42 = scmp.eq.s32.totalorder %s23, 0
      %p43 = por %p41, %p42
      %p44 = scmp.ne.s32.totalorder %s33, %s36
      %p45 = scmp.eq.s32.totalorder %s28, 1
      %p46 = por %p44, %p45
      %p47 = scmp.ne.s32.totalorder %s36, %s37
      %p48 = scmp.eq.s32.totalorder %s28, 0
      %p49 = por %p47, %p48
      %p50 = scmp.ne.s32.totalorder %s36, %s37
      %p51 = scmp.eq.s32.totalorder %s29, 1
      %p52 = por %p50, %p51
      %p54 = scmp.ne.s32.totalorder %s37, %s53
      %p55 = scmp.eq.s32.totalorder %s29, 0
      %p56 = por %p54, %p55
      %s57 = ssub.s32 %s23, %s30
      %p58 = scmp.eq.s32.totalorder %s57, 0
      %s60 = sadd.s32 %s59, 1
      %s61 = scalar_select %p58, %s59, %s60
      %p64 = pneg %p58
      %p65 = scmp.eq.s32.totalorder %s23, 1
      %p66 = por %p64, %p65
      %p67 = scmp.ne.s32.totalorder %s59, %s62
      %p68 = scmp.eq.s32.totalorder %s23, 0
      %p69 = por %p67, %p68
      %p70 = scmp.ne.s32.totalorder %s59, %s62
      %p71 = scmp.eq.s32.totalorder %s28, 1
      %p72 = por %p70, %p71
      %p73 = scmp.ne.s32.totalorder %s62, %s63
      %p74 = scmp.eq.s32.totalorder %s28, 0
      %p75 = por %p73, %p74
      %p76 = scmp.ne.s32.totalorder %s62, %s63
      %p77 = scmp.eq.s32.totalorder %s29, 1
      %p78 = por %p76, %p77
      %p80 = scmp.ne.s32.totalorder %s63, %s79
      %p81 = scmp.eq.s32.totalorder %s29, 0
      %p82 = por %p80, %p81
      %s84 = sadd.s32 %s83, 1
      %p87 = scmp.eq.s32.totalorder %s23, 1
      %p88 = scmp.ne.s32.totalorder %s83, %s85
      %p89 = scmp.eq.s32.totalorder %s23, 0
      %p90 = por %p88, %p89
      %p91 = scmp.ne.s32.totalorder %s83, %s85
      %p92 = scmp.eq.s32.totalorder %s28, 1
      %p93 = por %p91, %p92
      %p94 = scmp.ne.s32.totalorder %s85, %s86
      %p95 = scmp.eq.s32.totalorder %s28, 0
      %p96 = por %p94, %p95
      %p97 = scmp.ne.s32.totalorder %s85, %s86
      %p98 = scmp.eq.s32.totalorder %s29, 1
      %p99 = por %p97, %p98
      %p101 = scmp.ne.s32.totalorder %s86, %s100
      %p102 = scmp.eq.s32.totalorder %s29, 0
      %p103 = por %p101, %p102
      %s105 = sadd.s32 %s104, 1
      %p108 = scmp.eq.s32.totalorder %s23, 1
      %p109 = scmp.ne.s32.totalorder %s104, %s106
      %p110 = scmp.eq.s32.totalorder %s23, 0
      %p111 = por %p109, %p110
      %p112 = scmp.ne.s32.totalorder %s104, %s106
      %p113 = scmp.eq.s32.totalorder %s28, 1
      %p114 = por %p112, %p113
      %p115 = scmp.ne.s32.totalorder %s106, %s107
      %p116 = scmp.eq.s32.totalorder %s28, 0
      %p117 = por %p115, %p116
      %p118 = scmp.ne.s32.totalorder %s106, %s107
      %p119 = scmp.eq.s32.totalorder %s29, 1
      %p120 = por %p118, %p119
      %p122 = scmp.ne.s32.totalorder %s107, %s121
      %p123 = scmp.eq.s32.totalorder %s29, 0
      %p124 = por %p122, %p123
      %s126 = sadd.s32 %s125, 1
      %p129 = scmp.eq.s32.totalorder %s23, 1
      %p130 = scmp.ne.s32.totalorder %s125, %s127
      %p131 = scmp.eq.s32.totalorder %s23, 0
      %p132 = por %p130, %p131
      %p133 = scmp.ne.s32.totalorder %s125, %s127
      %p134 = scmp.eq.s32.totalorder %s28, 1
      %p135 = por %p133, %p134
      %p136 = scmp.ne.s32.totalorder %s127, %s128
      %p137 = scmp.eq.s32.totalorder %s28, 0
      %p138 = por %p136, %p137
      %p139 = scmp.ne.s32.totalorder %s127, %s128
      %p140 = scmp.eq.s32.totalorder %s29, 1
      %p141 = por %p139, %p140
      %p143 = scmp.ne.s32.totalorder %s128, %s142
      %p144 = scmp.eq.s32.totalorder %s29, 0
      %p145 = por %p143, %p144
      %s147 = sadd.s32 %s146, 1
      %p150 = scmp.eq.s32.totalorder %s23, 1
      %p151 = scmp.ne.s32.totalorder %s146, %s148
      %p152 = scmp.eq.s32.totalorder %s23, 0
      %p153 = por %p151, %p152
      %p154 = scmp.ne.s32.totalorder %s146, %s148
      %p155 = scmp.eq.s32.totalorder %s28, 1
      %p156 = por %p154, %p155
      %p157 = scmp.ne.s32.totalorder %s148, %s149
      %p158 = scmp.eq.s32.totalorder %s28, 0
      %p159 = por %p157, %p158
      %p160 = scmp.ne.s32.totalorder %s148, %s149
      %p161 = scmp.eq.s32.totalorder %s29, 1
      %p162 = por %p160, %p161
      %p164 = scmp.ne.s32.totalorder %s149, %s163
      %p165 = scmp.eq.s32.totalorder %s29, 0
      %p166 = por %p164, %p165
      %s168 = sadd.s32 %s167, 1
      %p171 = scmp.eq.s32.totalorder %s23, 1
      %p172 = scmp.ne.s32.totalorder %s167, %s169
      %p173 = scmp.eq.s32.totalorder %s23, 0
      %p174 = por %p172, %p173
      %p175 = scmp.ne.s32.totalorder %s167, %s169
      %p176 = scmp.eq.s32.totalorder %s28, 1
      %p177 = por %p175, %p176
      %p178 = scmp.ne.s32.totalorder %s169, %s170
      %p179 = scmp.eq.s32.totalorder %s28, 0
      %p180 = por %p178, %p179
      %p181 = scmp.ne.s32.totalorder %s169, %s170
      %p182 = scmp.eq.s32.totalorder %s29, 1
      %p183 = por %p181, %p182
      %p185 = scmp.ne.s32.totalorder %s170, %s184
      %p186 = scmp.eq.s32.totalorder %s29, 0
      %p187 = por %p185, %p186
      %s189 = sadd.s32 %s188, 1
      %p192 = scmp.eq.s32.totalorder %s23, 1
      %p193 = scmp.ne.s32.totalorder %s188, %s190
      %p194 = scmp.eq.s32.totalorder %s23, 0
      %p195 = por %p193, %p194
      %p196 = scmp.ne.s32.totalorder %s188, %s190
      %p197 = scmp.eq.s32.totalorder %s28, 1
      %p198 = por %p196, %p197
      %p199 = scmp.ne.s32.totalorder %s190, %s191
      %p200 = scmp.eq.s32.totalorder %s28, 0
      %p201 = por %p199, %p200
      %p202 = scmp.ne.s32.totalorder %s190, %s191
      %p203 = scmp.eq.s32.totalorder %s29, 1
      %p204 = por %p202, %p203
      %p206 = scmp.ne.s32.totalorder %s191, %s205
      %p207 = scmp.eq.s32.totalorder %s29, 0
      %p208 = por %p206, %p207
      %s210 = sadd.s32 %s209, 1
      %p213 = scmp.eq.s32.totalorder %s23, 1
      %p214 = scmp.ne.s32.totalorder %s209, %s211
      %p215 = scmp.eq.s32.totalorder %s23, 0
      %p216 = por %p214, %p215
      %p217 = scmp.ne.s32.totalorder %s209, %s211
      %p218 = scmp.eq.s32.totalorder %s28, 1
      %p219 = por %p217, %p218
      %p220 = scmp.ne.s32.totalorder %s211, %s212
      %p221 = scmp.eq.s32.totalorder %s28, 0
      %p222 = por %p220, %p221
      %p223 = scmp.ne.s32.totalorder %s211, %s212
      %p224 = scmp.eq.s32.totalorder %s29, 1
      %p225 = por %p223, %p224
      %p227 = scmp.ne.s32.totalorder %s212, %s226
      %p228 = scmp.eq.s32.totalorder %s29, 0
      %p229 = por %p227, %p228
      %s231 = sadd.s32 %s230, 1
      %p234 = scmp.eq.s32.totalorder %s23, 1
      %p235 = scmp.ne.s32.totalorder %s230, %s232
      %p236 = scmp.eq.s32.totalorder %s23, 0
      %p237 = por %p235, %p236
      %p238 = scmp.ne.s32.totalorder %s230, %s232
      %p239 = scmp.eq.s32.totalorder %s28, 1
      %p240 = por %p238, %p239
      %p241 = scmp.ne.s32.totalorder %s232, %s233
      %p242 = scmp.eq.s32.totalorder %s28, 0
      %p243 = por %p241, %p242
      %p244 = scmp.ne.s32.totalorder %s232, %s233
      %p245 = scmp.eq.s32.totalorder %s29, 1
      %p246 = por %p244, %p245
      %p248 = scmp.ne.s32.totalorder %s233, %s247
      %p249 = scmp.eq.s32.totalorder %s29, 0
      %p250 = por %p248, %p249
      %s251 = ssub.s32 %s23, %s30
      %p252 = scmp.eq.s32.totalorder %s251, 0
      %s254 = sadd.s32 %s253, 1
      %s255 = scalar_select %p252, %s253, %s254
      %p258 = pneg %p252
      %p259 = scmp.eq.s32.totalorder %s23, 1
      %p260 = por %p258, %p259
      %p261 = scmp.ne.s32.totalorder %s253, %s256
      %p262 = scmp.eq.s32.totalorder %s23, 0
      %p263 = por %p261, %p262
      %p264 = scmp.ne.s32.totalorder %s253, %s256
      %p265 = scmp.eq.s32.totalorder %s28, 1
      %p266 = por %p264, %p265
      %p267 = scmp.ne.s32.totalorder %s256, %s257
      %p268 = scmp.eq.s32.totalorder %s28, 0
      %p269 = por %p267, %p268
      %p270 = scmp.ne.s32.totalorder %s256, %s257
      %p271 = scmp.eq.s32.totalorder %s29, 1
      %p272 = por %p270, %p271
      %p274 = scmp.ne.s32.totalorder %s257, %s273
      %p275 = scmp.eq.s32.totalorder %s29, 0
      %p276 = por %p274, %p275
      %p277 = scmp.le.s32.totalorder 1, %s23
      %p278 = scmp.lt.s32.totalorder %s23, 3
      %p279 = pnand %p277, %p278
      %p280 = pneg %p279
      // Predicated region
      $region9: #{tpu_custom_call.1} parent=5 // pred_check
        _
      $region10: #{tpu_custom_call.1} parent=5 // pred_check_branch
        %282 = sbr.rel (%p279) target = $region12
      $region11: #{tpu_custom_call.1} parent=5 // pred_region
        %s283 = ssub.s32 %s23, 1
        // Predicated region
        $region13: #{tpu_custom_call.1} parent=11 // pred_check
          %p284 = pneg %p96
        $region14: #{tpu_custom_call.1} parent=11 // pred_check_branch
          %286 = sbr.rel (%p284) target = $region16
        $region15: #{tpu_custom_call.1} parent=11 // pred_region
          %288 = vsyncadd [#allocation5], 0
          %s289 = sshll.u32 %s2, 4
          %s290 = int_to_ptr.hbm [resolvable:$true] %s289
          %s291 = sshll.u32 [#allocation6], 4
          %s292 = int_to_ptr.vmem [resolvable:$true] %s291
          %297 = dma.hbm_to_vmem [thread:$0]  %s290, 1024, %s292, [#allocation5], 64, 64, 4
        $region16: #{tpu_custom_call.1} parent=11 // pred_fallthru
          _
        // Predicated region
        $region17: #{tpu_custom_call.1} parent=11 // pred_check
          %p298 = pneg %p117
        $region18: #{tpu_custom_call.1} parent=11 // pred_check_branch
          %300 = sbr.rel (%p298) target = $region20
        $region19: #{tpu_custom_call.1} parent=11 // pred_region
          %302 = vsyncadd [#allocation8], 0
          %s303 = sshll.u32 %s3, 4
          %s304 = int_to_ptr.hbm [resolvable:$true] %s303
          %s305 = sshll.u32 [#allocation7], 4
          %s306 = int_to_ptr.vmem [resolvable:$true] %s305
          %311 = dma.hbm_to_vmem [thread:$0]  %s304, 1024, %s306, [#allocation8], 64, 64, 4
        $region20: #{tpu_custom_call.1} parent=11 // pred_fallthru
          _
        // Predicated region
        $region21: #{tpu_custom_call.1} parent=11 // pred_check
          %p312 = pneg %p138
        $region22: #{tpu_custom_call.1} parent=11 // pred_check_branch
          %314 = sbr.rel (%p312) target = $region24
        $region23: #{tpu_custom_call.1} parent=11 // pred_region
          _
        $region24: #{tpu_custom_call.1} parent=11 // pred_fallthru
          _
        // Predicated region
        $region25: #{tpu_custom_call.1} parent=11 // pred_check
          %p315 = pneg %p159
        $region26: #{tpu_custom_call.1} parent=11 // pred_check_branch
          %317 = sbr.rel (%p315) target = $region28
        $region27: #{tpu_custom_call.1} parent=11 // pred_region
          _
        $region28: #{tpu_custom_call.1} parent=11 // pred_fallthru
          _
        // Predicated region
        $region29: #{tpu_custom_call.1} parent=11 // pred_check
          %p318 = pneg %p180
        $region30: #{tpu_custom_call.1} parent=11 // pred_check_branch
          %320 = sbr.rel (%p318) target = $region32
        $region31: #{tpu_custom_call.1} parent=11 // pred_region
          %322 = vsyncadd [#allocation8], 0
          %s323 = sshll.u32 %s6, 4
          %s324 = int_to_ptr.hbm [resolvable:$true] %s323
          %s325 = sshll.u32 [#allocation9], 4
          %s326 = int_to_ptr.vmem [resolvable:$true] %s325
          %331 = dma.hbm_to_vmem [thread:$0]  %s324, 1024, %s326, [#allocation8], 64, 64, 4
        $region32: #{tpu_custom_call.1} parent=11 // pred_fallthru
          _
        // Predicated region
        $region33: #{tpu_custom_call.1} parent=11 // pred_check
          %p332 = pneg %p201
        $region34: #{tpu_custom_call.1} parent=11 // pred_check_branch
          %334 = sbr.rel (%p332) target = $region36
        $region35: #{tpu_custom_call.1} parent=11 // pred_region
          _
        $region36: #{tpu_custom_call.1} parent=11 // pred_fallthru
          _
        // Predicated region
        $region37: #{tpu_custom_call.1} parent=11 // pred_check
          %p335 = pneg %p222
        $region38: #{tpu_custom_call.1} parent=11 // pred_check_branch
          %337 = sbr.rel (%p335) target = $region40
        $region39: #{tpu_custom_call.1} parent=11 // pred_region
          _
        $region40: #{tpu_custom_call.1} parent=11 // pred_fallthru
          _
        // Predicated region
        $region41: #{tpu_custom_call.1} parent=11 // pred_check
          %p338 = pneg %p243
        $region42: #{tpu_custom_call.1} parent=11 // pred_check_branch
          %340 = sbr.rel (%p338) target = $region44
        $region43: #{tpu_custom_call.1} parent=11 // pred_region
          _
        $region44: #{tpu_custom_call.1} parent=11 // pred_fallthru
          _
      $region12: #{tpu_custom_call.1} parent=5 // pred_fallthru
        _
      %p341 = scmp.lt.s32.totalorder %s23, 2
      // Predicated region
      $region45: #{tpu_custom_call.1} parent=5 // pred_check
        %p342 = pneg %p341
      $region46: #{tpu_custom_call.1} parent=5 // pred_check_branch
        %344 = sbr.rel (%p342) target = $region48
      $region47: #{tpu_custom_call.1} parent=5 // pred_region
        // Predicated region
        $region49: #{tpu_custom_call.1} parent=47 // pred_check
          %p345 = pneg %p43
        $region50: #{tpu_custom_call.1} parent=47 // pred_check_branch
          %347 = sbr.rel (%p345) target = $region52
        $region51: #{tpu_custom_call.1} parent=47 // pred_region
          %s348 = sand.u32 %s33, 1
          %s349 = scalar_lea.sflag [#allocation3], %s348
          %s350 = sand.u32 %s33, 1
          %s351 = smul.addr %s350, 128
          %s352 = scalar_lea.vmem [#allocation2], %s351
          %s353 = smul.u32 16, %s23
          %355 = vsyncadd %s349, 0
          %s356 = smul.addr %s353, 8
          %s357 = scalar_lea.hbm %s0, %s356
          %s358 = sshll.u32 %s357, 4
          %s359 = int_to_ptr.hbm [resolvable:$true] %s358
          %s360 = sshll.u32 %s352, 4
          %s361 = int_to_ptr.vmem [resolvable:$true] %s360
          %366 = dma.hbm_to_vmem [thread:$0]  %s359, 2048, %s361, %s349, 128, 128, 8
        $region52: #{tpu_custom_call.1} parent=47 // pred_fallthru
          _
        // Predicated region
        $region53: #{tpu_custom_call.1} parent=47 // pred_check
          %p367 = pneg %p69
        $region54: #{tpu_custom_call.1} parent=47 // pred_check_branch
          %369 = sbr.rel (%p367) target = $region56
        $region55: #{tpu_custom_call.1} parent=47 // pred_region
          %s370 = sand.u32 %s23, 1
          %s371 = scalar_lea.sflag [#allocation5], %s370
          %s372 = sand.u32 %s59, 1
          %s373 = smul.addr %s372, 128
          %s374 = scalar_lea.vmem [#allocation4], %s373
          %s375 = smul.u32 16, %s23
          %377 = vsyncadd %s371, 0
          %s378 = smul.addr %s375, 8
          %s379 = scalar_lea.hbm %s1, %s378
          %s380 = sshll.u32 %s379, 4
          %s381 = int_to_ptr.hbm [resolvable:$true] %s380
          %s382 = sshll.u32 %s374, 4
          %s383 = int_to_ptr.vmem [resolvable:$true] %s382
          %388 = dma.hbm_to_vmem [thread:$0]  %s381, 2048, %s383, %s371, 128, 128, 8
        $region56: #{tpu_custom_call.1} parent=47 // pred_fallthru
          _
      $region48: #{tpu_custom_call.1} parent=5 // pred_fallthru
        _
      %p389 = scmp.le.s32.totalorder 1, %s23
      %p390 = scmp.lt.s32.totalorder %s23, 3
      %p391 = pnand %p389, %p390
      %p392 = pneg %p391
      // Predicated region
      $region57: #{tpu_custom_call.1} parent=5 // pred_check
        _
      $region58: #{tpu_custom_call.1} parent=5 // pred_check_branch
        %394 = sbr.rel (%p391) target = $region60
      $region59: #{tpu_custom_call.1} parent=5 // pred_region
        %s395 = ssub.s32 %s23, 1
        %s396 = sand.u32 %s36, 1
        %s397 = scalar_lea.sflag [#allocation3], %s396
        %s398 = sand.u32 %s36, 1
        %s399 = smul.addr %s398, 128
        %s400 = scalar_lea.vmem [#allocation2], %s399
        // Predicated region
        $region61: #{tpu_custom_call.1} parent=59 // pred_check
          %p401 = pneg %p49
        $region62: #{tpu_custom_call.1} parent=59 // pred_check_branch
          %403 = sbr.rel (%p401) target = $region64
        $region63: #{tpu_custom_call.1} parent=59 // pred_region
          %405 = dma.done %s397, 2048
        $region64: #{tpu_custom_call.1} parent=59 // pred_fallthru
          _
        %s406 = sand.u32 %s28, 1
        %s407 = scalar_lea.sflag [#allocation5], %s406
        %s408 = sand.u32 %s62, 1
        %s409 = smul.addr %s408, 128
        %s410 = scalar_lea.vmem [#allocation4], %s409
        // Predicated region
        $region65: #{tpu_custom_call.1} parent=59 // pred_check
          %p411 = pneg %p75
        $region66: #{tpu_custom_call.1} parent=59 // pred_check_branch
          %413 = sbr.rel (%p411) target = $region68
        $region67: #{tpu_custom_call.1} parent=59 // pred_region
          %415 = dma.done %s407, 2048
        $region68: #{tpu_custom_call.1} parent=59 // pred_fallthru
          _
        // Predicated region
        $region69: #{tpu_custom_call.1} parent=59 // pred_check
          %p416 = pneg %p96
        $region70: #{tpu_custom_call.1} parent=59 // pred_check_branch
          %418 = sbr.rel (%p416) target = $region72
        $region71: #{tpu_custom_call.1} parent=59 // pred_region
          %420 = dma.done [#allocation5], 1024
        $region72: #{tpu_custom_call.1} parent=59 // pred_fallthru
          _
        // Predicated region
        $region73: #{tpu_custom_call.1} parent=59 // pred_check
          %p421 = pneg %p117
        $region74: #{tpu_custom_call.1} parent=59 // pred_check_branch
          %423 = sbr.rel (%p421) target = $region76
        $region75: #{tpu_custom_call.1} parent=59 // pred_region
          %425 = dma.done [#allocation8], 1024
        $region76: #{tpu_custom_call.1} parent=59 // pred_fallthru
          _
        // Predicated region
        $region77: #{tpu_custom_call.1} parent=59 // pred_check
          %p426 = pneg %p180
        $region78: #{tpu_custom_call.1} parent=59 // pred_check_branch
          %428 = sbr.rel (%p426) target = $region80
        $region79: #{tpu_custom_call.1} parent=59 // pred_region
          %430 = dma.done [#allocation8], 1024
        $region80: #{tpu_custom_call.1} parent=59 // pred_fallthru
          _
        %s431 = sand.u32 %s36, 1
        %s432 = scalar_lea.sflag [#allocation3], %s431
        %s433 = sand.u32 %s36, 1
        %s434 = smul.addr %s433, 128
        %s435 = scalar_lea.vmem [#allocation2], %s434
        %p436 = pneg %p49
        %p437 = pneg %p46
        %s438 = sand.u32 %s28, 1
        %s439 = scalar_lea.sflag [#allocation5], %s438
        %s440 = sand.u32 %s62, 1
        %s441 = smul.addr %s440, 128
        %s442 = scalar_lea.vmem [#allocation4], %s441
        %p443 = pneg %p75
        %p444 = pneg %p72
        %p445 = pneg %p96
        %p446 = pneg %p93
        %p447 = pneg %p117
        %p448 = pneg %p114
        %p449 = pneg %p138
        %p450 = pneg %p135
        %p451 = pneg %p159
        %p452 = pneg %p156
        %p453 = pneg %p180
        %p454 = pneg %p177
        %p455 = pneg %p201
        %p456 = pneg %p198
        %p457 = pneg %p222
        %p458 = pneg %p219
        %p459 = pneg %p243
        %p460 = pneg %p240
        %p461 = pneg %p269
        %p462 = pneg %p266
        %s463 = smul.u32 16, %s28
        %p464 = scmp.lt.s32.totalorder %s463, 31
        %s465 = scalar_select %p464, %s463, 31
        %s466 = smul.addr %s465, 8
        %s467 = scalar_lea.vmem %s10, %s466
        %s468 = smul.u32 16, %s28
        %s469 = smul.u32 16, %s28
        %s470 = smul.u32 16, %s28
        %p471 = scmp.lt.s32.totalorder %s470, 31
        %s472 = scalar_select %p471, %s470, 31
        %s473 = smul.addr %s472, 8
        %s474 = scalar_lea.vmem %s10, %s473
        %s475 = smul.u32 16, %s28
        %v476 = vld [vmem:[%s400] sm:$0xff]
        %v477 = vld [vmem:[%s400 + $0x8] sm:$0xff]
        %v478 = vld [vmem:[%s400 + $0x10] sm:$0xff]
        %v479 = vld [vmem:[%s400 + $0x18] sm:$0xff]
        %v480 = vld [vmem:[%s400 + $0x20] sm:$0xff]
        %v481 = vld [vmem:[%s400 + $0x28] sm:$0xff]
        %v482 = vld [vmem:[%s400 + $0x30] sm:$0xff]
        %v483 = vld [vmem:[%s400 + $0x38] sm:$0xff]
        %v484 = vld [vmem:[%s400 + $0x40] sm:$0xff]
        %v485 = vld [vmem:[%s400 + $0x48] sm:$0xff]
        %v486 = vld [vmem:[%s400 + $0x50] sm:$0xff]
        %v487 = vld [vmem:[%s400 + $0x58] sm:$0xff]
        %v488 = vld [vmem:[%s400 + $0x60] sm:$0xff]
        %v489 = vld [vmem:[%s400 + $0x68] sm:$0xff]
        %v490 = vld [vmem:[%s400 + $0x70] sm:$0xff]
        %v491 = vld [vmem:[%s400 + $0x78] sm:$0xff]
        %v492 = vpack.c.bf16 %v477, %v476
        %v493 = vpack.c.bf16 %v479, %v478
        %v494 = vpack.c.bf16 %v481, %v480
        %v495 = vpack.c.bf16 %v483, %v482
        %v496 = vpack.c.bf16 %v485, %v484
        %v497 = vpack.c.bf16 %v487, %v486
        %v498 = vpack.c.bf16 %v489, %v488
        %v499 = vpack.c.bf16 %v491, %v490
        %v500 = vld [vmem:[%s410] sm:$0xff]
        %v501 = vld [vmem:[%s410 + $0x8] sm:$0xff]
        %v502 = vld [vmem:[%s410 + $0x10] sm:$0xff]
        %v503 = vld [vmem:[%s410 + $0x18] sm:$0xff]
        %v504 = vld [vmem:[%s410 + $0x20] sm:$0xff]
        %v505 = vld [vmem:[%s410 + $0x28] sm:$0xff]
        %v506 = vld [vmem:[%s410 + $0x30] sm:$0xff]
        %v507 = vld [vmem:[%s410 + $0x38] sm:$0xff]
        %v508 = vld [vmem:[%s410 + $0x40] sm:$0xff]
        %v509 = vld [vmem:[%s410 + $0x48] sm:$0xff]
        %v510 = vld [vmem:[%s410 + $0x50] sm:$0xff]
        %v511 = vld [vmem:[%s410 + $0x58] sm:$0xff]
        %v512 = vld [vmem:[%s410 + $0x60] sm:$0xff]
        %v513 = vld [vmem:[%s410 + $0x68] sm:$0xff]
        %v514 = vld [vmem:[%s410 + $0x70] sm:$0xff]
        %v515 = vld [vmem:[%s410 + $0x78] sm:$0xff]
        %v516 = vpack.c.bf16 %v501, %v500
        %v517 = vpack.c.bf16 %v503, %v502
        %v518 = vpack.c.bf16 %v505, %v504
        %v519 = vpack.c.bf16 %v507, %v506
        %v520 = vpack.c.bf16 %v509, %v508
        %v521 = vpack.c.bf16 %v511, %v510
        %v522 = vpack.c.bf16 %v513, %v512
        %v523 = vpack.c.bf16 %v515, %v514
        %v524 = vld [vmem:[#allocation6] sm:$0xf]
        %v525 = vld [vmem:[#allocation6 + $0x4] sm:$0xf]
        %v526 = vld [vmem:[#allocation6 + $0x8] sm:$0xf]
        %v527 = vld [vmem:[#allocation6 + $0xc] sm:$0xf]
        %v528 = vld [vmem:[#allocation6 + $0x10] sm:$0xf]
        %v529 = vld [vmem:[#allocation6 + $0x14] sm:$0xf]
        %v530 = vld [vmem:[#allocation6 + $0x18] sm:$0xf]
        %v531 = vld [vmem:[#allocation6 + $0x1c] sm:$0xf]
        %v532 = vld [vmem:[#allocation6 + $0x20] sm:$0xf]
        %v533 = vld [vmem:[#allocation6 + $0x24] sm:$0xf]
        %v534 = vld [vmem:[#allocation6 + $0x28] sm:$0xf]
        %v535 = vld [vmem:[#allocation6 + $0x2c] sm:$0xf]
        %v536 = vld [vmem:[#allocation6 + $0x30] sm:$0xf]
        %v537 = vld [vmem:[#allocation6 + $0x34] sm:$0xf]
        %v538 = vld [vmem:[#allocation6 + $0x38] sm:$0xf]
        %v539 = vld [vmem:[#allocation6 + $0x3c] sm:$0xf]
        %v540 = vld [vmem:[#allocation7] sm:$0xf]
        %v541 = vld [vmem:[#allocation7 + $0x4] sm:$0xf]
        %v542 = vld [vmem:[#allocation7 + $0x8] sm:$0xf]
        %v543 = vld [vmem:[#allocation7 + $0xc] sm:$0xf]
        %v544 = vld [vmem:[#allocation7 + $0x10] sm:$0xf]
        %v545 = vld [vmem:[#allocation7 + $0x14] sm:$0xf]
        %v546 = vld [vmem:[#allocation7 + $0x18] sm:$0xf]
        %v547 = vld [vmem:[#allocation7 + $0x1c] sm:$0xf]
        %v548 = vld [vmem:[#allocation7 + $0x20] sm:$0xf]
        %v549 = vld [vmem:[#allocation7 + $0x24] sm:$0xf]
        %v550 = vld [vmem:[#allocation7 + $0x28] sm:$0xf]
        %v551 = vld [vmem:[#allocation7 + $0x2c] sm:$0xf]
        %v552 = vld [vmem:[#allocation7 + $0x30] sm:$0xf]
        %v553 = vld [vmem:[#allocation7 + $0x34] sm:$0xf]
        %v554 = vld [vmem:[#allocation7 + $0x38] sm:$0xf]
        %v555 = vld [vmem:[#allocation7 + $0x3c] sm:$0xf]
        %v572 = vunpack.c.l.b16 %v540
        %v573 = vunpack.c.l.b16 %v541
        %v574 = vunpack.c.l.b16 %v542
        %v575 = vunpack.c.l.b16 %v543
        %v576 = vunpack.c.l.b16 %v544
        %v577 = vunpack.c.l.b16 %v545
        %v578 = vunpack.c.l.b16 %v546
        %v579 = vunpack.c.l.b16 %v547
        %v580 = vunpack.c.l.b16 %v548
        %v581 = vunpack.c.l.b16 %v549
        %v582 = vunpack.c.l.b16 %v550
        %v583 = vunpack.c.l.b16 %v551
        %v584 = vunpack.c.l.b16 %v552
        %v585 = vunpack.c.l.b16 %v553
        %v586 = vunpack.c.l.b16 %v554
        %v587 = vunpack.c.l.b16 %v555
        %v588 = vpack.c.b16 %v573, %v572
        %v589 = vpack.c.b16 %v575, %v574
        %v590 = vpack.c.b16 %v577, %v576
        %v591 = vpack.c.b16 %v579, %v578
        %v592 = vpack.c.b16 %v581, %v580
        %v593 = vpack.c.b16 %v583, %v582
        %v594 = vpack.c.b16 %v585, %v584
        %v595 = vpack.c.b16 %v587, %v586
        %604 = vmatpush.bf16.msra.mxu0 %v595
        %605 = vmatpush.bf16.msra.mxu0 %v594
        %606 = vmatpush.bf16.msra.mxu0 %v593
        %607 = vmatpush.bf16.msra.mxu0 %v592
        %608 = vmatpush.bf16.msra.mxu0 %v591
        %609 = vmatpush.bf16.msra.mxu0 %v590
        %610 = vmatpush.bf16.msra.mxu0 %v589
        %611 = vmatpush.bf16.msra.mxu0 %v588
        %612 = vmatmul.bf16.gmra.mxu0 %v516
        %v613 = vpop.f32.mrf.mxu0
        %v614 = vadd.f32 0.0, %v613
        %v615 = vpop.f32.mrf.mxu0
        %v616 = vadd.f32 0.0, %v615
        %617 = vmatmul.bf16.gmra.mxu0 %v517
        %v618 = vpop.f32.mrf.mxu0
        %v619 = vadd.f32 0.0, %v618
        %v620 = vpop.f32.mrf.mxu0
        %v621 = vadd.f32 0.0, %v620
        %622 = vmatmul.bf16.gmra.mxu0 %v518
        %v623 = vpop.f32.mrf.mxu0
        %v624 = vadd.f32 0.0, %v623
        %v625 = vpop.f32.mrf.mxu0
        %v626 = vadd.f32 0.0, %v625
        %627 = vmatmul.bf16.gmra.mxu0 %v519
        %v628 = vpop.f32.mrf.mxu0
        %v629 = vadd.f32 0.0, %v628
        %v630 = vpop.f32.mrf.mxu0
        %v631 = vadd.f32 0.0, %v630
        %632 = vmatmul.bf16.gmra.mxu0 %v520
        %v633 = vpop.f32.mrf.mxu0
        %v634 = vadd.f32 0.0, %v633
        %v635 = vpop.f32.mrf.mxu0
        %v636 = vadd.f32 0.0, %v635
        %637 = vmatmul.bf16.gmra.mxu0 %v521
        %v638 = vpop.f32.mrf.mxu0
        %v639 = vadd.f32 0.0, %v638
        %v640 = vpop.f32.mrf.mxu0
        %v641 = vadd.f32 0.0, %v640
        %642 = vmatmul.bf16.gmra.mxu0 %v522
        %v643 = vpop.f32.mrf.mxu0
        %v644 = vadd.f32 0.0, %v643
        %v645 = vpop.f32.mrf.mxu0
        %v646 = vadd.f32 0.0, %v645
        %647 = vmatmul.bf16.gmra.mxu0 %v523
        %v648 = vpop.f32.mrf.mxu0
        %v649 = vadd.f32 0.0, %v648
        %v650 = vpop.f32.mrf.mxu0
        %v651 = vadd.f32 0.0, %v650
        %652 = vdwg.mxu0
        %v669 = vunpack.c.l.b16 %v524
        %v670 = vunpack.c.l.b16 %v525
        %v671 = vunpack.c.l.b16 %v526
        %v672 = vunpack.c.l.b16 %v527
        %v673 = vunpack.c.l.b16 %v528
        %v674 = vunpack.c.l.b16 %v529
        %v675 = vunpack.c.l.b16 %v530
        %v676 = vunpack.c.l.b16 %v531
        %v677 = vunpack.c.l.b16 %v532
        %v678 = vunpack.c.l.b16 %v533
        %v679 = vunpack.c.l.b16 %v534
        %v680 = vunpack.c.l.b16 %v535
        %v681 = vunpack.c.l.b16 %v536
        %v682 = vunpack.c.l.b16 %v537
        %v683 = vunpack.c.l.b16 %v538
        %v684 = vunpack.c.l.b16 %v539
        %v685 = vpack.c.b16 %v670, %v669
        %v686 = vpack.c.b16 %v672, %v671
        %v687 = vpack.c.b16 %v674, %v673
        %v688 = vpack.c.b16 %v676, %v675
        %v689 = vpack.c.b16 %v678, %v677
        %v690 = vpack.c.b16 %v680, %v679
        %v691 = vpack.c.b16 %v682, %v681
        %v692 = vpack.c.b16 %v684, %v683
        %701 = vmatpush.bf16.msra.mxu0 %v692
        %702 = vmatpush.bf16.msra.mxu0 %v691
        %703 = vmatpush.bf16.msra.mxu0 %v690
        %704 = vmatpush.bf16.msra.mxu0 %v689
        %705 = vmatpush.bf16.msra.mxu0 %v688
        %706 = vmatpush.bf16.msra.mxu0 %v687
        %707 = vmatpush.bf16.msra.mxu0 %v686
        %708 = vmatpush.bf16.msra.mxu0 %v685
        %709 = vmatmul.bf16.gmra.mxu0 %v492
        %v710 = vpop.f32.mrf.mxu0
        %v711 = vadd.f32 %v614, %v710
        %v712 = vpop.f32.mrf.mxu0
        %v713 = vadd.f32 %v616, %v712
        %714 = vmatmul.bf16.gmra.mxu0 %v493
        %v715 = vpop.f32.mrf.mxu0
        %v716 = vadd.f32 %v619, %v715
        %v717 = vpop.f32.mrf.mxu0
        %v718 = vadd.f32 %v621, %v717
        %719 = vmatmul.bf16.gmra.mxu0 %v494
        %v720 = vpop.f32.mrf.mxu0
        %v721 = vadd.f32 %v624, %v720
        %v722 = vpop.f32.mrf.mxu0
        %v723 = vadd.f32 %v626, %v722
        %724 = vmatmul.bf16.gmra.mxu0 %v495
        %v725 = vpop.f32.mrf.mxu0
        %v726 = vadd.f32 %v629, %v725
        %v727 = vpop.f32.mrf.mxu0
        %v728 = vadd.f32 %v631, %v727
        %729 = vmatmul.bf16.gmra.mxu0 %v496
        %v730 = vpop.f32.mrf.mxu0
        %v731 = vadd.f32 %v634, %v730
        %v732 = vpop.f32.mrf.mxu0
        %v733 = vadd.f32 %v636, %v732
        %734 = vmatmul.bf16.gmra.mxu0 %v497
        %v735 = vpop.f32.mrf.mxu0
        %v736 = vadd.f32 %v639, %v735
        %v737 = vpop.f32.mrf.mxu0
        %v738 = vadd.f32 %v641, %v737
        %739 = vmatmul.bf16.gmra.mxu0 %v498
        %v740 = vpop.f32.mrf.mxu0
        %v741 = vadd.f32 %v644, %v740
        %v742 = vpop.f32.mrf.mxu0
        %v743 = vadd.f32 %v646, %v742
        %744 = vmatmul.bf16.gmra.mxu0 %v499
        %v745 = vpop.f32.mrf.mxu0
        %v746 = vadd.f32 %v649, %v745
        %v747 = vpop.f32.mrf.mxu0
        %v748 = vadd.f32 %v651, %v747
        %749 = vdwg.mxu0
        %v750 = vld [vmem:[%s4] sm:$0x1]
        %v751 = vld [vmem:[%s5] sm:$0x1]
        %752 = vadd.xlane.f32.xlu0 %v711
        %v753 = vpop.xlane.xlu0 %752
        %754 = vadd.xlane.f32.xlu0 %v713
        %v755 = vpop.xlane.xlu0 %754
        %756 = vadd.xlane.f32.xlu0 %v716
        %v757 = vpop.xlane.xlu0 %756
        %758 = vadd.xlane.f32.xlu0 %v718
        %v759 = vpop.xlane.xlu0 %758
        %760 = vadd.xlane.f32.xlu0 %v721
        %v761 = vpop.xlane.xlu0 %760
        %762 = vadd.xlane.f32.xlu0 %v723
        %v763 = vpop.xlane.xlu0 %762
        %764 = vadd.xlane.f32.xlu0 %v726
        %v765 = vpop.xlane.xlu0 %764
        %766 = vadd.xlane.f32.xlu0 %v728
        %v767 = vpop.xlane.xlu0 %766
        %768 = vadd.xlane.f32.xlu0 %v731
        %v769 = vpop.xlane.xlu0 %768
        %770 = vadd.xlane.f32.xlu0 %v733
        %v771 = vpop.xlane.xlu0 %770
        %772 = vadd.xlane.f32.xlu0 %v736
        %v773 = vpop.xlane.xlu0 %772
        %774 = vadd.xlane.f32.xlu0 %v738
        %v775 = vpop.xlane.xlu0 %774
        %776 = vadd.xlane.f32.xlu0 %v741
        %v777 = vpop.xlane.xlu0 %776
        %778 = vadd.xlane.f32.xlu0 %v743
        %v779 = vpop.xlane.xlu0 %778
        %780 = vadd.xlane.f32.xlu0 %v746
        %v781 = vpop.xlane.xlu0 %780
        %782 = vadd.xlane.f32.xlu0 %v748
        %v783 = vpop.xlane.xlu0 %782
        %v784 = vrcp.pop 128.0
        %v785 = vmul.f32 128.0, %v784
        %v786 = vsub.f32 1.0, %v785
        %v787 = vmul.f32 %v784, %v786
        %v788 = vadd.f32 %v784, %v787
        %vm789 = vweird.f32 %v784
        %v790 = vsel %vm789, %v784, %v788
        %v791 = vmul.f32 %v753, %v790
        %v792 = vmul.f32 %v755, %v790
        %v793 = vmul.f32 %v757, %v790
        %v794 = vmul.f32 %v759, %v790
        %v795 = vmul.f32 %v761, %v790
        %v796 = vmul.f32 %v763, %v790
        %v797 = vmul.f32 %v765, %v790
        %v798 = vmul.f32 %v767, %v790
        %v799 = vmul.f32 %v769, %v790
        %v800 = vmul.f32 %v771, %v790
        %v801 = vmul.f32 %v773, %v790
        %v802 = vmul.f32 %v775, %v790
        %v803 = vmul.f32 %v777, %v790
        %v804 = vmul.f32 %v779, %v790
        %v805 = vmul.f32 %v781, %v790
        %v806 = vmul.f32 %v783, %v790
        %v807 = vmul.f32 %v711, %v711
        %v808 = vmul.f32 %v713, %v713
        %v809 = vmul.f32 %v716, %v716
        %v810 = vmul.f32 %v718, %v718
        %v811 = vmul.f32 %v721, %v721
        %v812 = vmul.f32 %v723, %v723
        %v813 = vmul.f32 %v726, %v726
        %v814 = vmul.f32 %v728, %v728
        %v815 = vmul.f32 %v731, %v731
        %v816 = vmul.f32 %v733, %v733
        %v817 = vmul.f32 %v736, %v736
        %v818 = vmul.f32 %v738, %v738
        %v819 = vmul.f32 %v741, %v741
        %v820 = vmul.f32 %v743, %v743
        %v821 = vmul.f32 %v746, %v746
        %v822 = vmul.f32 %v748, %v748
        %823 = vadd.xlane.f32.xlu0 %v807
        %v824 = vpop.xlane.xlu0 %823
        %825 = vadd.xlane.f32.xlu0 %v808
        %v826 = vpop.xlane.xlu0 %825
        %827 = vadd.xlane.f32.xlu0 %v809
        %v828 = vpop.xlane.xlu0 %827
        %829 = vadd.xlane.f32.xlu0 %v810
        %v830 = vpop.xlane.xlu0 %829
        %831 = vadd.xlane.f32.xlu0 %v811
        %v832 = vpop.xlane.xlu0 %831
        %833 = vadd.xlane.f32.xlu0 %v812
        %v834 = vpop.xlane.xlu0 %833
        %835 = vadd.xlane.f32.xlu0 %v813
        %v836 = vpop.xlane.xlu0 %835
        %837 = vadd.xlane.f32.xlu0 %v814
        %v838 = vpop.xlane.xlu0 %837
        %839 = vadd.xlane.f32.xlu0 %v815
        %v840 = vpop.xlane.xlu0 %839
        %841 = vadd.xlane.f32.xlu0 %v816
        %v842 = vpop.xlane.xlu0 %841
        %843 = vadd.xlane.f32.xlu0 %v817
        %v844 = vpop.xlane.xlu0 %843
        %845 = vadd.xlane.f32.xlu0 %v818
        %v846 = vpop.xlane.xlu0 %845
        %847 = vadd.xlane.f32.xlu0 %v819
        %v848 = vpop.xlane.xlu0 %847
        %849 = vadd.xlane.f32.xlu0 %v820
        %v850 = vpop.xlane.xlu0 %849
        %851 = vadd.xlane.f32.xlu0 %v821
        %v852 = vpop.xlane.xlu0 %851
        %853 = vadd.xlane.f32.xlu0 %v822
        %v854 = vpop.xlane.xlu0 %853
        %v855 = vmul.f32 %v824, %v790
        %v856 = vmul.f32 %v826, %v790
        %v857 = vmul.f32 %v828, %v790
        %v858 = vmul.f32 %v830, %v790
        %v859 = vmul.f32 %v832, %v790
        %v860 = vmul.f32 %v834, %v790
        %v861 = vmul.f32 %v836, %v790
        %v862 = vmul.f32 %v838, %v790
        %v863 = vmul.f32 %v840, %v790
        %v864 = vmul.f32 %v842, %v790
        %v865 = vmul.f32 %v844, %v790
        %v866 = vmul.f32 %v846, %v790
        %v867 = vmul.f32 %v848, %v790
        %v868 = vmul.f32 %v850, %v790
        %v869 = vmul.f32 %v852, %v790
        %v870 = vmul.f32 %v854, %v790
        %v871 = vmul.f32 %v791, %v791
        %v872 = vmul.f32 %v792, %v792
        %v873 = vmul.f32 %v793, %v793
        %v874 = vmul.f32 %v794, %v794
        %v875 = vmul.f32 %v795, %v795
        %v876 = vmul.f32 %v796, %v796
        %v877 = vmul.f32 %v797, %v797
        %v878 = vmul.f32 %v798, %v798
        %v879 = vmul.f32 %v799, %v799
        %v880 = vmul.f32 %v800, %v800
        %v881 = vmul.f32 %v801, %v801
        %v882 = vmul.f32 %v802, %v802
        %v883 = vmul.f32 %v803, %v803
        %v884 = vmul.f32 %v804, %v804
        %v885 = vmul.f32 %v805, %v805
        %v886 = vmul.f32 %v806, %v806
        %v887 = vsub.f32 %v855, %v871
        %v888 = vsub.f32 %v856, %v872
        %v889 = vsub.f32 %v857, %v873
        %v890 = vsub.f32 %v858, %v874
        %v891 = vsub.f32 %v859, %v875
        %v892 = vsub.f32 %v860, %v876
        %v893 = vsub.f32 %v861, %v877
        %v894 = vsub.f32 %v862, %v878
        %v895 = vsub.f32 %v863, %v879
        %v896 = vsub.f32 %v864, %v880
        %v897 = vsub.f32 %v865, %v881
        %v898 = vsub.f32 %v866, %v882
        %v899 = vsub.f32 %v867, %v883
        %v900 = vsub.f32 %v868, %v884
        %v901 = vsub.f32 %v869, %v885
        %v902 = vsub.f32 %v870, %v886
        %v903 = vsub.f32 %v711, %v791
        %v904 = vsub.f32 %v713, %v792
        %v905 = vsub.f32 %v716, %v793
        %v906 = vsub.f32 %v718, %v794
        %v907 = vsub.f32 %v721, %v795
        %v908 = vsub.f32 %v723, %v796
        %v909 = vsub.f32 %v726, %v797
        %v910 = vsub.f32 %v728, %v798
        %v911 = vsub.f32 %v731, %v799
        %v912 = vsub.f32 %v733, %v800
        %v913 = vsub.f32 %v736, %v801
        %v914 = vsub.f32 %v738, %v802
        %v915 = vsub.f32 %v741, %v803
        %v916 = vsub.f32 %v743, %v804
        %v917 = vsub.f32 %v746, %v805
        %v918 = vsub.f32 %v748, %v806
        %v919 = vadd.f32 %v887, 1e-05
        %v920 = vadd.f32 %v888, 1e-05
        %v921 = vadd.f32 %v889, 1e-05
        %v922 = vadd.f32 %v890, 1e-05
        %v923 = vadd.f32 %v891, 1e-05
        %v924 = vadd.f32 %v892, 1e-05
        %v925 = vadd.f32 %v893, 1e-05
        %v926 = vadd.f32 %v894, 1e-05
        %v927 = vadd.f32 %v895, 1e-05
        %v928 = vadd.f32 %v896, 1e-05
        %v929 = vadd.f32 %v897, 1e-05
        %v930 = vadd.f32 %v898, 1e-05
        %v931 = vadd.f32 %v899, 1e-05
        %v932 = vadd.f32 %v900, 1e-05
        %v933 = vadd.f32 %v901, 1e-05
        %v934 = vadd.f32 %v902, 1e-05
        %v935 = vrsqrt.pop %v919
        %v936 = vmul.f32 %v935, %v919
        %v937 = vmul.f32 %v936, %v935
        %v938 = vmul.f32 0.5, %v937
        %v939 = vsub.f32 1.5, %v938
        %v940 = vmul.f32 %v935, %v939
        %vm941 = vweird.f32 %v919
        %vm942 = vweird.f32 %v935
        %vm943 = vmor %vm941, %vm942
        %v944 = vsel %vm943, %v935, %v940
        %v945 = vrsqrt.pop %v920
        %v946 = vmul.f32 %v945, %v920
        %v947 = vmul.f32 %v946, %v945
        %v948 = vmul.f32 0.5, %v947
        %v949 = vsub.f32 1.5, %v948
        %v950 = vmul.f32 %v945, %v949
        %vm951 = vweird.f32 %v920
        %vm952 = vweird.f32 %v945
        %vm953 = vmor %vm951, %vm952
        %v954 = vsel %vm953, %v945, %v950
        %v955 = vrsqrt.pop %v921
        %v956 = vmul.f32 %v955, %v921
        %v957 = vmul.f32 %v956, %v955
        %v958 = vmul.f32 0.5, %v957
        %v959 = vsub.f32 1.5, %v958
        %v960 = vmul.f32 %v955, %v959
        %vm961 = vweird.f32 %v921
        %vm962 = vweird.f32 %v955
        %vm963 = vmor %vm961, %vm962
        %v964 = vsel %vm963, %v955, %v960
        %v965 = vrsqrt.pop %v922
        %v966 = vmul.f32 %v965, %v922
        %v967 = vmul.f32 %v966, %v965
        %v968 = vmul.f32 0.5, %v967
        %v969 = vsub.f32 1.5, %v968
        %v970 = vmul.f32 %v965, %v969
        %vm971 = vweird.f32 %v922
        %vm972 = vweird.f32 %v965
        %vm973 = vmor %vm971, %vm972
        %v974 = vsel %vm973, %v965, %v970
        %v975 = vrsqrt.pop %v923
        %v976 = vmul.f32 %v975, %v923
        %v977 = vmul.f32 %v976, %v975
        %v978 = vmul.f32 0.5, %v977
        %v979 = vsub.f32 1.5, %v978
        %v980 = vmul.f32 %v975, %v979
        %vm981 = vweird.f32 %v923
        %vm982 = vweird.f32 %v975
        %vm983 = vmor %vm981, %vm982
        %v984 = vsel %vm983, %v975, %v980
        %v985 = vrsqrt.pop %v924
        %v986 = vmul.f32 %v985, %v924
        %v987 = vmul.f32 %v986, %v985
        %v988 = vmul.f32 0.5, %v987
        %v989 = vsub.f32 1.5, %v988
        %v990 = vmul.f32 %v985, %v989
        %vm991 = vweird.f32 %v924
        %vm992 = vweird.f32 %v985
        %vm993 = vmor %vm991, %vm992
        %v994 = vsel %vm993, %v985, %v990
        %v995 = vrsqrt.pop %v925
        %v996 = vmul.f32 %v995, %v925
        %v997 = vmul.f32 %v996, %v995
        %v998 = vmul.f32 0.5, %v997
        %v999 = vsub.f32 1.5, %v998
        %v1000 = vmul.f32 %v995, %v999
        %vm1001 = vweird.f32 %v925
        %vm1002 = vweird.f32 %v995
        %vm1003 = vmor %vm1001, %vm1002
        %v1004 = vsel %vm1003, %v995, %v1000
        %v1005 = vrsqrt.pop %v926
        %v1006 = vmul.f32 %v1005, %v926
        %v1007 = vmul.f32 %v1006, %v1005
        %v1008 = vmul.f32 0.5, %v1007
        %v1009 = vsub.f32 1.5, %v1008
        %v1010 = vmul.f32 %v1005, %v1009
        %vm1011 = vweird.f32 %v926
        %vm1012 = vweird.f32 %v1005
        %vm1013 = vmor %vm1011, %vm1012
        %v1014 = vsel %vm1013, %v1005, %v1010
        %v1015 = vrsqrt.pop %v927
        %v1016 = vmul.f32 %v1015, %v927
        %v1017 = vmul.f32 %v1016, %v1015
        %v1018 = vmul.f32 0.5, %v1017
        %v1019 = vsub.f32 1.5, %v1018
        %v1020 = vmul.f32 %v1015, %v1019
        %vm1021 = vweird.f32 %v927
        %vm1022 = vweird.f32 %v1015
        %vm1023 = vmor %vm1021, %vm1022
        %v1024 = vsel %vm1023, %v1015, %v1020
        %v1025 = vrsqrt.pop %v928
        %v1026 = vmul.f32 %v1025, %v928
        %v1027 = vmul.f32 %v1026, %v1025
        %v1028 = vmul.f32 0.5, %v1027
        %v1029 = vsub.f32 1.5, %v1028
        %v1030 = vmul.f32 %v1025, %v1029
        %vm1031 = vweird.f32 %v928
        %vm1032 = vweird.f32 %v1025
        %vm1033 = vmor %vm1031, %vm1032
        %v1034 = vsel %vm1033, %v1025, %v1030
        %v1035 = vrsqrt.pop %v929
        %v1036 = vmul.f32 %v1035, %v929
        %v1037 = vmul.f32 %v1036, %v1035
        %v1038 = vmul.f32 0.5, %v1037
        %v1039 = vsub.f32 1.5, %v1038
        %v1040 = vmul.f32 %v1035, %v1039
        %vm1041 = vweird.f32 %v929
        %vm1042 = vweird.f32 %v1035
        %vm1043 = vmor %vm1041, %vm1042
        %v1044 = vsel %vm1043, %v1035, %v1040
        %v1045 = vrsqrt.pop %v930
        %v1046 = vmul.f32 %v1045, %v930
        %v1047 = vmul.f32 %v1046, %v1045
        %v1048 = vmul.f32 0.5, %v1047
        %v1049 = vsub.f32 1.5, %v1048
        %v1050 = vmul.f32 %v1045, %v1049
        %vm1051 = vweird.f32 %v930
        %vm1052 = vweird.f32 %v1045
        %vm1053 = vmor %vm1051, %vm1052
        %v1054 = vsel %vm1053, %v1045, %v1050
        %v1055 = vrsqrt.pop %v931
        %v1056 = vmul.f32 %v1055, %v931
        %v1057 = vmul.f32 %v1056, %v1055
        %v1058 = vmul.f32 0.5, %v1057
        %v1059 = vsub.f32 1.5, %v1058
        %v1060 = vmul.f32 %v1055, %v1059
        %vm1061 = vweird.f32 %v931
        %vm1062 = vweird.f32 %v1055
        %vm1063 = vmor %vm1061, %vm1062
        %v1064 = vsel %vm1063, %v1055, %v1060
        %v1065 = vrsqrt.pop %v932
        %v1066 = vmul.f32 %v1065, %v932
        %v1067 = vmul.f32 %v1066, %v1065
        %v1068 = vmul.f32 0.5, %v1067
        %v1069 = vsub.f32 1.5, %v1068
        %v1070 = vmul.f32 %v1065, %v1069
        %vm1071 = vweird.f32 %v932
        %vm1072 = vweird.f32 %v1065
        %vm1073 = vmor %vm1071, %vm1072
        %v1074 = vsel %vm1073, %v1065, %v1070
        %v1075 = vrsqrt.pop %v933
        %v1076 = vmul.f32 %v1075, %v933
        %v1077 = vmul.f32 %v1076, %v1075
        %v1078 = vmul.f32 0.5, %v1077
        %v1079 = vsub.f32 1.5, %v1078
        %v1080 = vmul.f32 %v1075, %v1079
        %vm1081 = vweird.f32 %v933
        %vm1082 = vweird.f32 %v1075
        %vm1083 = vmor %vm1081, %vm1082
        %v1084 = vsel %vm1083, %v1075, %v1080
        %v1085 = vrsqrt.pop %v934
        %v1086 = vmul.f32 %v1085, %v934
        %v1087 = vmul.f32 %v1086, %v1085
        %v1088 = vmul.f32 0.5, %v1087
        %v1089 = vsub.f32 1.5, %v1088
        %v1090 = vmul.f32 %v1085, %v1089
        %vm1091 = vweird.f32 %v934
        %vm1092 = vweird.f32 %v1085
        %vm1093 = vmor %vm1091, %vm1092
        %v1094 = vsel %vm1093, %v1085, %v1090
        %v1095 = vmul.f32 %v903, %v944
        %v1096 = vmul.f32 %v904, %v954
        %v1097 = vmul.f32 %v905, %v964
        %v1098 = vmul.f32 %v906, %v974
        %v1099 = vmul.f32 %v907, %v984
        %v1100 = vmul.f32 %v908, %v994
        %v1101 = vmul.f32 %v909, %v1004
        %v1102 = vmul.f32 %v910, %v1014
        %v1103 = vmul.f32 %v911, %v1024
        %v1104 = vmul.f32 %v912, %v1034
        %v1105 = vmul.f32 %v913, %v1044
        %v1106 = vmul.f32 %v914, %v1054
        %v1107 = vmul.f32 %v915, %v1064
        %v1108 = vmul.f32 %v916, %v1074
        %v1109 = vmul.f32 %v917, %v1084
        %v1110 = vmul.f32 %v918, %v1094
        %v1112 = vperm.slane %v750, 0
        %v1114 = vmul.f32 %v1095, %v1112
        %v1115 = vmul.f32 %v1096, %v1112
        %v1116 = vmul.f32 %v1097, %v1112
        %v1117 = vmul.f32 %v1098, %v1112
        %v1118 = vmul.f32 %v1099, %v1112
        %v1119 = vmul.f32 %v1100, %v1112
        %v1120 = vmul.f32 %v1101, %v1112
        %v1121 = vmul.f32 %v1102, %v1112
        %v1122 = vmul.f32 %v1103, %v1112
        %v1123 = vmul.f32 %v1104, %v1112
        %v1124 = vmul.f32 %v1105, %v1112
        %v1125 = vmul.f32 %v1106, %v1112
        %v1126 = vmul.f32 %v1107, %v1112
        %v1127 = vmul.f32 %v1108, %v1112
        %v1128 = vmul.f32 %v1109, %v1112
        %v1129 = vmul.f32 %v1110, %v1112
        %v1131 = vperm.slane %v751, 0
        %v1133 = vadd.f32 %v1114, %v1131
        %v1134 = vadd.f32 %v1115, %v1131
        %v1135 = vadd.f32 %v1116, %v1131
        %v1136 = vadd.f32 %v1117, %v1131
        %v1137 = vadd.f32 %v1118, %v1131
        %v1138 = vadd.f32 %v1119, %v1131
        %v1139 = vadd.f32 %v1120, %v1131
        %v1140 = vadd.f32 %v1121, %v1131
        %v1141 = vadd.f32 %v1122, %v1131
        %v1142 = vadd.f32 %v1123, %v1131
        %v1143 = vadd.f32 %v1124, %v1131
        %v1144 = vadd.f32 %v1125, %v1131
        %v1145 = vadd.f32 %v1126, %v1131
        %v1146 = vadd.f32 %v1127, %v1131
        %v1147 = vadd.f32 %v1128, %v1131
        %v1148 = vadd.f32 %v1129, %v1131
        %v1149 = vxor.u32 %v1133, 2147483648
        %v1150 = vxor.u32 %v1134, 2147483648
        %v1151 = vxor.u32 %v1135, 2147483648
        %v1152 = vxor.u32 %v1136, 2147483648
        %v1153 = vxor.u32 %v1137, 2147483648
        %v1154 = vxor.u32 %v1138, 2147483648
        %v1155 = vxor.u32 %v1139, 2147483648
        %v1156 = vxor.u32 %v1140, 2147483648
        %v1157 = vxor.u32 %v1141, 2147483648
        %v1158 = vxor.u32 %v1142, 2147483648
        %v1159 = vxor.u32 %v1143, 2147483648
        %v1160 = vxor.u32 %v1144, 2147483648
        %v1161 = vxor.u32 %v1145, 2147483648
        %v1162 = vxor.u32 %v1146, 2147483648
        %v1163 = vxor.u32 %v1147, 2147483648
        %v1164 = vxor.u32 %v1148, 2147483648
        %v1165 = vmul.f32 %v1149, 1.442695
        %v1166 = vpow.pop %v1165
        %v1167 = vmul.f32 %v1150, 1.442695
        %v1168 = vpow.pop %v1167
        %v1169 = vmul.f32 %v1151, 1.442695
        %v1170 = vpow.pop %v1169
        %v1171 = vmul.f32 %v1152, 1.442695
        %v1172 = vpow.pop %v1171
        %v1173 = vmul.f32 %v1153, 1.442695
        %v1174 = vpow.pop %v1173
        %v1175 = vmul.f32 %v1154, 1.442695
        %v1176 = vpow.pop %v1175
        %v1177 = vmul.f32 %v1155, 1.442695
        %v1178 = vpow.pop %v1177
        %v1179 = vmul.f32 %v1156, 1.442695
        %v1180 = vpow.pop %v1179
        %v1181 = vmul.f32 %v1157, 1.442695
        %v1182 = vpow.pop %v1181
        %v1183 = vmul.f32 %v1158, 1.442695
        %v1184 = vpow.pop %v1183
        %v1185 = vmul.f32 %v1159, 1.442695
        %v1186 = vpow.pop %v1185
        %v1187 = vmul.f32 %v1160, 1.442695
        %v1188 = vpow.pop %v1187
        %v1189 = vmul.f32 %v1161, 1.442695
        %v1190 = vpow.pop %v1189
        %v1191 = vmul.f32 %v1162, 1.442695
        %v1192 = vpow.pop %v1191
        %v1193 = vmul.f32 %v1163, 1.442695
        %v1194 = vpow.pop %v1193
        %v1195 = vmul.f32 %v1164, 1.442695
        %v1196 = vpow.pop %v1195
        %v1197 = vadd.f32 %v1166, 1.0
        %v1198 = vadd.f32 %v1168, 1.0
        %v1199 = vadd.f32 %v1170, 1.0
        %v1200 = vadd.f32 %v1172, 1.0
        %v1201 = vadd.f32 %v1174, 1.0
        %v1202 = vadd.f32 %v1176, 1.0
        %v1203 = vadd.f32 %v1178, 1.0
        %v1204 = vadd.f32 %v1180, 1.0
        %v1205 = vadd.f32 %v1182, 1.0
        %v1206 = vadd.f32 %v1184, 1.0
        %v1207 = vadd.f32 %v1186, 1.0
        %v1208 = vadd.f32 %v1188, 1.0
        %v1209 = vadd.f32 %v1190, 1.0
        %v1210 = vadd.f32 %v1192, 1.0
        %v1211 = vadd.f32 %v1194, 1.0
        %v1212 = vadd.f32 %v1196, 1.0
        %v1213 = vrcp.pop %v1197
        %v1214 = vmul.f32 %v1197, %v1213
        %v1215 = vsub.f32 1.0, %v1214
        %v1216 = vmul.f32 %v1213, %v1215
        %v1217 = vadd.f32 %v1213, %v1216
        %vm1218 = vweird.f32 %v1197
        %vm1219 = vweird.f32 %v1213
        %vm1220 = vmor %vm1218, %vm1219
        %v1221 = vsel %vm1220, %v1213, %v1217
        %v1222 = vand.u32 2147483647, %v1197
        %vm1223 = vcmp.eq.f32.partialorder %v1222, 8.507059e+37
        %v1224 = vand.u32 %v1197, 2147483648
        %v1225 = vor.u32 1.1754944e-38, %v1224
        %v1226 = vsel %vm1223, %v1225, %v1221
        %v1227 = vmul.f32 1.0, %v1226
        %v1228 = vrcp.pop %v1198
        %v1229 = vmul.f32 %v1198, %v1228
        %v1230 = vsub.f32 1.0, %v1229
        %v1231 = vmul.f32 %v1228, %v1230
        %v1232 = vadd.f32 %v1228, %v1231
        %vm1233 = vweird.f32 %v1198
        %vm1234 = vweird.f32 %v1228
        %vm1235 = vmor %vm1233, %vm1234
        %v1236 = vsel %vm1235, %v1228, %v1232
        %v1237 = vand.u32 2147483647, %v1198
        %vm1238 = vcmp.eq.f32.partialorder %v1237, 8.507059e+37
        %v1239 = vand.u32 %v1198, 2147483648
        %v1240 = vor.u32 1.1754944e-38, %v1239
        %v1241 = vsel %vm1238, %v1240, %v1236
        %v1242 = vmul.f32 1.0, %v1241
        %v1243 = vrcp.pop %v1199
        %v1244 = vmul.f32 %v1199, %v1243
        %v1245 = vsub.f32 1.0, %v1244
        %v1246 = vmul.f32 %v1243, %v1245
        %v1247 = vadd.f32 %v1243, %v1246
        %vm1248 = vweird.f32 %v1199
        %vm1249 = vweird.f32 %v1243
        %vm1250 = vmor %vm1248, %vm1249
        %v1251 = vsel %vm1250, %v1243, %v1247
        %v1252 = vand.u32 2147483647, %v1199
        %vm1253 = vcmp.eq.f32.partialorder %v1252, 8.507059e+37
        %v1254 = vand.u32 %v1199, 2147483648
        %v1255 = vor.u32 1.1754944e-38, %v1254
        %v1256 = vsel %vm1253, %v1255, %v1251
        %v1257 = vmul.f32 1.0, %v1256
        %v1258 = vrcp.pop %v1200
        %v1259 = vmul.f32 %v1200, %v1258
        %v1260 = vsub.f32 1.0, %v1259
        %v1261 = vmul.f32 %v1258, %v1260
        %v1262 = vadd.f32 %v1258, %v1261
        %vm1263 = vweird.f32 %v1200
        %vm1264 = vweird.f32 %v1258
        %vm1265 = vmor %vm1263, %vm1264
        %v1266 = vsel %vm1265, %v1258, %v1262
        %v1267 = vand.u32 2147483647, %v1200
        %vm1268 = vcmp.eq.f32.partialorder %v1267, 8.507059e+37
        %v1269 = vand.u32 %v1200, 2147483648
        %v1270 = vor.u32 1.1754944e-38, %v1269
        %v1271 = vsel %vm1268, %v1270, %v1266
        %v1272 = vmul.f32 1.0, %v1271
        %v1273 = vrcp.pop %v1201
        %v1274 = vmul.f32 %v1201, %v1273
        %v1275 = vsub.f32 1.0, %v1274
        %v1276 = vmul.f32 %v1273, %v1275
        %v1277 = vadd.f32 %v1273, %v1276
        %vm1278 = vweird.f32 %v1201
        %vm1279 = vweird.f32 %v1273
        %vm1280 = vmor %vm1278, %vm1279
        %v1281 = vsel %vm1280, %v1273, %v1277
        %v1282 = vand.u32 2147483647, %v1201
        %vm1283 = vcmp.eq.f32.partialorder %v1282, 8.507059e+37
        %v1284 = vand.u32 %v1201, 2147483648
        %v1285 = vor.u32 1.1754944e-38, %v1284
        %v1286 = vsel %vm1283, %v1285, %v1281
        %v1287 = vmul.f32 1.0, %v1286
        %v1288 = vrcp.pop %v1202
        %v1289 = vmul.f32 %v1202, %v1288
        %v1290 = vsub.f32 1.0, %v1289
        %v1291 = vmul.f32 %v1288, %v1290
        %v1292 = vadd.f32 %v1288, %v1291
        %vm1293 = vweird.f32 %v1202
        %vm1294 = vweird.f32 %v1288
        %vm1295 = vmor %vm1293, %vm1294
        %v1296 = vsel %vm1295, %v1288, %v1292
        %v1297 = vand.u32 2147483647, %v1202
        %vm1298 = vcmp.eq.f32.partialorder %v1297, 8.507059e+37
        %v1299 = vand.u32 %v1202, 2147483648
        %v1300 = vor.u32 1.1754944e-38, %v1299
        %v1301 = vsel %vm1298, %v1300, %v1296
        %v1302 = vmul.f32 1.0, %v1301
        %v1303 = vrcp.pop %v1203
        %v1304 = vmul.f32 %v1203, %v1303
        %v1305 = vsub.f32 1.0, %v1304
        %v1306 = vmul.f32 %v1303, %v1305
        %v1307 = vadd.f32 %v1303, %v1306
        %vm1308 = vweird.f32 %v1203
        %vm1309 = vweird.f32 %v1303
        %vm1310 = vmor %vm1308, %vm1309
        %v1311 = vsel %vm1310, %v1303, %v1307
        %v1312 = vand.u32 2147483647, %v1203
        %vm1313 = vcmp.eq.f32.partialorder %v1312, 8.507059e+37
        %v1314 = vand.u32 %v1203, 2147483648
        %v1315 = vor.u32 1.1754944e-38, %v1314
        %v1316 = vsel %vm1313, %v1315, %v1311
        %v1317 = vmul.f32 1.0, %v1316
        %v1318 = vrcp.pop %v1204
        %v1319 = vmul.f32 %v1204, %v1318
        %v1320 = vsub.f32 1.0, %v1319
        %v1321 = vmul.f32 %v1318, %v1320
        %v1322 = vadd.f32 %v1318, %v1321
        %vm1323 = vweird.f32 %v1204
        %vm1324 = vweird.f32 %v1318
        %vm1325 = vmor %vm1323, %vm1324
        %v1326 = vsel %vm1325, %v1318, %v1322
        %v1327 = vand.u32 2147483647, %v1204
        %vm1328 = vcmp.eq.f32.partialorder %v1327, 8.507059e+37
        %v1329 = vand.u32 %v1204, 2147483648
        %v1330 = vor.u32 1.1754944e-38, %v1329
        %v1331 = vsel %vm1328, %v1330, %v1326
        %v1332 = vmul.f32 1.0, %v1331
        %v1333 = vrcp.pop %v1205
        %v1334 = vmul.f32 %v1205, %v1333
        %v1335 = vsub.f32 1.0, %v1334
        %v1336 = vmul.f32 %v1333, %v1335
        %v1337 = vadd.f32 %v1333, %v1336
        %vm1338 = vweird.f32 %v1205
        %vm1339 = vweird.f32 %v1333
        %vm1340 = vmor %vm1338, %vm1339
        %v1341 = vsel %vm1340, %v1333, %v1337
        %v1342 = vand.u32 2147483647, %v1205
        %vm1343 = vcmp.eq.f32.partialorder %v1342, 8.507059e+37
        %v1344 = vand.u32 %v1205, 2147483648
        %v1345 = vor.u32 1.1754944e-38, %v1344
        %v1346 = vsel %vm1343, %v1345, %v1341
        %v1347 = vmul.f32 1.0, %v1346
        %v1348 = vrcp.pop %v1206
        %v1349 = vmul.f32 %v1206, %v1348
        %v1350 = vsub.f32 1.0, %v1349
        %v1351 = vmul.f32 %v1348, %v1350
        %v1352 = vadd.f32 %v1348, %v1351
        %vm1353 = vweird.f32 %v1206
        %vm1354 = vweird.f32 %v1348
        %vm1355 = vmor %vm1353, %vm1354
        %v1356 = vsel %vm1355, %v1348, %v1352
        %v1357 = vand.u32 2147483647, %v1206
        %vm1358 = vcmp.eq.f32.partialorder %v1357, 8.507059e+37
        %v1359 = vand.u32 %v1206, 2147483648
        %v1360 = vor.u32 1.1754944e-38, %v1359
        %v1361 = vsel %vm1358, %v1360, %v1356
        %v1362 = vmul.f32 1.0, %v1361
        %v1363 = vrcp.pop %v1207
        %v1364 = vmul.f32 %v1207, %v1363
        %v1365 = vsub.f32 1.0, %v1364
        %v1366 = vmul.f32 %v1363, %v1365
        %v1367 = vadd.f32 %v1363, %v1366
        %vm1368 = vweird.f32 %v1207
        %vm1369 = vweird.f32 %v1363
        %vm1370 = vmor %vm1368, %vm1369
        %v1371 = vsel %vm1370, %v1363, %v1367
        %v1372 = vand.u32 2147483647, %v1207
        %vm1373 = vcmp.eq.f32.partialorder %v1372, 8.507059e+37
        %v1374 = vand.u32 %v1207, 2147483648
        %v1375 = vor.u32 1.1754944e-38, %v1374
        %v1376 = vsel %vm1373, %v1375, %v1371
        %v1377 = vmul.f32 1.0, %v1376
        %v1378 = vrcp.pop %v1208
        %v1379 = vmul.f32 %v1208, %v1378
        %v1380 = vsub.f32 1.0, %v1379
        %v1381 = vmul.f32 %v1378, %v1380
        %v1382 = vadd.f32 %v1378, %v1381
        %vm1383 = vweird.f32 %v1208
        %vm1384 = vweird.f32 %v1378
        %vm1385 = vmor %vm1383, %vm1384
        %v1386 = vsel %vm1385, %v1378, %v1382
        %v1387 = vand.u32 2147483647, %v1208
        %vm1388 = vcmp.eq.f32.partialorder %v1387, 8.507059e+37
        %v1389 = vand.u32 %v1208, 2147483648
        %v1390 = vor.u32 1.1754944e-38, %v1389
        %v1391 = vsel %vm1388, %v1390, %v1386
        %v1392 = vmul.f32 1.0, %v1391
        %v1393 = vrcp.pop %v1209
        %v1394 = vmul.f32 %v1209, %v1393
        %v1395 = vsub.f32 1.0, %v1394
        %v1396 = vmul.f32 %v1393, %v1395
        %v1397 = vadd.f32 %v1393, %v1396
        %vm1398 = vweird.f32 %v1209
        %vm1399 = vweird.f32 %v1393
        %vm1400 = vmor %vm1398, %vm1399
        %v1401 = vsel %vm1400, %v1393, %v1397
        %v1402 = vand.u32 2147483647, %v1209
        %vm1403 = vcmp.eq.f32.partialorder %v1402, 8.507059e+37
        %v1404 = vand.u32 %v1209, 2147483648
        %v1405 = vor.u32 1.1754944e-38, %v1404
        %v1406 = vsel %vm1403, %v1405, %v1401
        %v1407 = vmul.f32 1.0, %v1406
        %v1408 = vrcp.pop %v1210
        %v1409 = vmul.f32 %v1210, %v1408
        %v1410 = vsub.f32 1.0, %v1409
        %v1411 = vmul.f32 %v1408, %v1410
        %v1412 = vadd.f32 %v1408, %v1411
        %vm1413 = vweird.f32 %v1210
        %vm1414 = vweird.f32 %v1408
        %vm1415 = vmor %vm1413, %vm1414
        %v1416 = vsel %vm1415, %v1408, %v1412
        %v1417 = vand.u32 2147483647, %v1210
        %vm1418 = vcmp.eq.f32.partialorder %v1417, 8.507059e+37
        %v1419 = vand.u32 %v1210, 2147483648
        %v1420 = vor.u32 1.1754944e-38, %v1419
        %v1421 = vsel %vm1418, %v1420, %v1416
        %v1422 = vmul.f32 1.0, %v1421
        %v1423 = vrcp.pop %v1211
        %v1424 = vmul.f32 %v1211, %v1423
        %v1425 = vsub.f32 1.0, %v1424
        %v1426 = vmul.f32 %v1423, %v1425
        %v1427 = vadd.f32 %v1423, %v1426
        %vm1428 = vweird.f32 %v1211
        %vm1429 = vweird.f32 %v1423
        %vm1430 = vmor %vm1428, %vm1429
        %v1431 = vsel %vm1430, %v1423, %v1427
        %v1432 = vand.u32 2147483647, %v1211
        %vm1433 = vcmp.eq.f32.partialorder %v1432, 8.507059e+37
        %v1434 = vand.u32 %v1211, 2147483648
        %v1435 = vor.u32 1.1754944e-38, %v1434
        %v1436 = vsel %vm1433, %v1435, %v1431
        %v1437 = vmul.f32 1.0, %v1436
        %v1438 = vrcp.pop %v1212
        %v1439 = vmul.f32 %v1212, %v1438
        %v1440 = vsub.f32 1.0, %v1439
        %v1441 = vmul.f32 %v1438, %v1440
        %v1442 = vadd.f32 %v1438, %v1441
        %vm1443 = vweird.f32 %v1212
        %vm1444 = vweird.f32 %v1438
        %vm1445 = vmor %vm1443, %vm1444
        %v1446 = vsel %vm1445, %v1438, %v1442
        %v1447 = vand.u32 2147483647, %v1212
        %vm1448 = vcmp.eq.f32.partialorder %v1447, 8.507059e+37
        %v1449 = vand.u32 %v1212, 2147483648
        %v1450 = vor.u32 1.1754944e-38, %v1449
        %v1451 = vsel %vm1448, %v1450, %v1446
        %v1452 = vmul.f32 1.0, %v1451
        %v1453 = vmul.f32 %v1133, %v1227
        %v1454 = vmul.f32 %v1134, %v1242
        %v1455 = vmul.f32 %v1135, %v1257
        %v1456 = vmul.f32 %v1136, %v1272
        %v1457 = vmul.f32 %v1137, %v1287
        %v1458 = vmul.f32 %v1138, %v1302
        %v1459 = vmul.f32 %v1139, %v1317
        %v1460 = vmul.f32 %v1140, %v1332
        %v1461 = vmul.f32 %v1141, %v1347
        %v1462 = vmul.f32 %v1142, %v1362
        %v1463 = vmul.f32 %v1143, %v1377
        %v1464 = vmul.f32 %v1144, %v1392
        %v1465 = vmul.f32 %v1145, %v1407
        %v1466 = vmul.f32 %v1146, %v1422
        %v1467 = vmul.f32 %v1147, %v1437
        %v1468 = vmul.f32 %v1148, %v1452
        %v1469 = vpack.c.bf16 %v1454, %v1453
        %v1470 = vpack.c.bf16 %v1456, %v1455
        %v1471 = vpack.c.bf16 %v1458, %v1457
        %v1472 = vpack.c.bf16 %v1460, %v1459
        %v1473 = vpack.c.bf16 %v1462, %v1461
        %v1474 = vpack.c.bf16 %v1464, %v1463
        %v1475 = vpack.c.bf16 %v1466, %v1465
        %v1476 = vpack.c.bf16 %v1468, %v1467
        %v1477 = vld [vmem:[#allocation9] sm:$0xf]
        %v1478 = vld [vmem:[#allocation9 + $0x4] sm:$0xf]
        %v1479 = vld [vmem:[#allocation9 + $0x8] sm:$0xf]
        %v1480 = vld [vmem:[#allocation9 + $0xc] sm:$0xf]
        %v1481 = vld [vmem:[#allocation9 + $0x10] sm:$0xf]
        %v1482 = vld [vmem:[#allocation9 + $0x14] sm:$0xf]
        %v1483 = vld [vmem:[#allocation9 + $0x18] sm:$0xf]
        %v1484 = vld [vmem:[#allocation9 + $0x1c] sm:$0xf]
        %v1485 = vld [vmem:[#allocation9 + $0x20] sm:$0xf]
        %v1486 = vld [vmem:[#allocation9 + $0x24] sm:$0xf]
        %v1487 = vld [vmem:[#allocation9 + $0x28] sm:$0xf]
        %v1488 = vld [vmem:[#allocation9 + $0x2c] sm:$0xf]
        %v1489 = vld [vmem:[#allocation9 + $0x30] sm:$0xf]
        %v1490 = vld [vmem:[#allocation9 + $0x34] sm:$0xf]
        %v1491 = vld [vmem:[#allocation9 + $0x38] sm:$0xf]
        %v1492 = vld [vmem:[#allocation9 + $0x3c] sm:$0xf]
        %v1509 = vunpack.c.l.b16 %v1477
        %v1510 = vunpack.c.l.b16 %v1478
        %v1511 = vunpack.c.l.b16 %v1479
        %v1512 = vunpack.c.l.b16 %v1480
        %v1513 = vunpack.c.l.b16 %v1481
        %v1514 = vunpack.c.l.b16 %v1482
        %v1515 = vunpack.c.l.b16 %v1483
        %v1516 = vunpack.c.l.b16 %v1484
        %v1517 = vunpack.c.l.b16 %v1485
        %v1518 = vunpack.c.l.b16 %v1486
        %v1519 = vunpack.c.l.b16 %v1487
        %v1520 = vunpack.c.l.b16 %v1488
        %v1521 = vunpack.c.l.b16 %v1489
        %v1522 = vunpack.c.l.b16 %v1490
        %v1523 = vunpack.c.l.b16 %v1491
        %v1524 = vunpack.c.l.b16 %v1492
        %v1525 = vpack.c.b16 %v1510, %v1509
        %v1526 = vpack.c.b16 %v1512, %v1511
        %v1527 = vpack.c.b16 %v1514, %v1513
        %v1528 = vpack.c.b16 %v1516, %v1515
        %v1529 = vpack.c.b16 %v1518, %v1517
        %v1530 = vpack.c.b16 %v1520, %v1519
        %v1531 = vpack.c.b16 %v1522, %v1521
        %v1532 = vpack.c.b16 %v1524, %v1523
        %1541 = vmatpush.bf16.msra.mxu0 %v1532
        %1542 = vmatpush.bf16.msra.mxu0 %v1531
        %1543 = vmatpush.bf16.msra.mxu0 %v1530
        %1544 = vmatpush.bf16.msra.mxu0 %v1529
        %1545 = vmatpush.bf16.msra.mxu0 %v1528
        %1546 = vmatpush.bf16.msra.mxu0 %v1527
        %1547 = vmatpush.bf16.msra.mxu0 %v1526
        %1548 = vmatpush.bf16.msra.mxu0 %v1525
        %1549 = vmatmul.bf16.gmra.mxu0 %v1469
        %v1550 = vpop.f32.mrf.mxu0
        %v1551 = vadd.f32 0.0, %v1550
        %v1552 = vpop.f32.mrf.mxu0
        %v1553 = vadd.f32 0.0, %v1552
        %1554 = vmatmul.bf16.gmra.mxu0 %v1470
        %v1555 = vpop.f32.mrf.mxu0
        %v1556 = vadd.f32 0.0, %v1555
        %v1557 = vpop.f32.mrf.mxu0
        %v1558 = vadd.f32 0.0, %v1557
        %1559 = vmatmul.bf16.gmra.mxu0 %v1471
        %v1560 = vpop.f32.mrf.mxu0
        %v1561 = vadd.f32 0.0, %v1560
        %v1562 = vpop.f32.mrf.mxu0
        %v1563 = vadd.f32 0.0, %v1562
        %1564 = vmatmul.bf16.gmra.mxu0 %v1472
        %v1565 = vpop.f32.mrf.mxu0
        %v1566 = vadd.f32 0.0, %v1565
        %v1567 = vpop.f32.mrf.mxu0
        %v1568 = vadd.f32 0.0, %v1567
        %1569 = vmatmul.bf16.gmra.mxu0 %v1473
        %v1570 = vpop.f32.mrf.mxu0
        %v1571 = vadd.f32 0.0, %v1570
        %v1572 = vpop.f32.mrf.mxu0
        %v1573 = vadd.f32 0.0, %v1572
        %1574 = vmatmul.bf16.gmra.mxu0 %v1474
        %v1575 = vpop.f32.mrf.mxu0
        %v1576 = vadd.f32 0.0, %v1575
        %v1577 = vpop.f32.mrf.mxu0
        %v1578 = vadd.f32 0.0, %v1577
        %1579 = vmatmul.bf16.gmra.mxu0 %v1475
        %v1580 = vpop.f32.mrf.mxu0
        %v1581 = vadd.f32 0.0, %v1580
        %v1582 = vpop.f32.mrf.mxu0
        %v1583 = vadd.f32 0.0, %v1582
        %1584 = vmatmul.bf16.gmra.mxu0 %v1476
        %v1585 = vpop.f32.mrf.mxu0
        %v1586 = vadd.f32 0.0, %v1585
        %v1587 = vpop.f32.mrf.mxu0
        %v1588 = vadd.f32 0.0, %v1587
        %1589 = vdwg.mxu0
        %v1590 = vld [vmem:[%s7] sm:$0x1]
        %v1591 = vld [vmem:[%s8] sm:$0x1]
        %1592 = vadd.xlane.f32.xlu0 %v1551
        %v1593 = vpop.xlane.xlu0 %1592
        %1594 = vadd.xlane.f32.xlu0 %v1553
        %v1595 = vpop.xlane.xlu0 %1594
        %1596 = vadd.xlane.f32.xlu0 %v1556
        %v1597 = vpop.xlane.xlu0 %1596
        %1598 = vadd.xlane.f32.xlu0 %v1558
        %v1599 = vpop.xlane.xlu0 %1598
        %1600 = vadd.xlane.f32.xlu0 %v1561
        %v1601 = vpop.xlane.xlu0 %1600
        %1602 = vadd.xlane.f32.xlu0 %v1563
        %v1603 = vpop.xlane.xlu0 %1602
        %1604 = vadd.xlane.f32.xlu0 %v1566
        %v1605 = vpop.xlane.xlu0 %1604
        %1606 = vadd.xlane.f32.xlu0 %v1568
        %v1607 = vpop.xlane.xlu0 %1606
        %1608 = vadd.xlane.f32.xlu0 %v1571
        %v1609 = vpop.xlane.xlu0 %1608
        %1610 = vadd.xlane.f32.xlu0 %v1573
        %v1611 = vpop.xlane.xlu0 %1610
        %1612 = vadd.xlane.f32.xlu0 %v1576
        %v1613 = vpop.xlane.xlu0 %1612
        %1614 = vadd.xlane.f32.xlu0 %v1578
        %v1615 = vpop.xlane.xlu0 %1614
        %1616 = vadd.xlane.f32.xlu0 %v1581
        %v1617 = vpop.xlane.xlu0 %1616
        %1618 = vadd.xlane.f32.xlu0 %v1583
        %v1619 = vpop.xlane.xlu0 %1618
        %1620 = vadd.xlane.f32.xlu0 %v1586
        %v1621 = vpop.xlane.xlu0 %1620
        %1622 = vadd.xlane.f32.xlu0 %v1588
        %v1623 = vpop.xlane.xlu0 %1622
        %v1624 = vmul.f32 %v1593, %v790
        %v1625 = vmul.f32 %v1595, %v790
        %v1626 = vmul.f32 %v1597, %v790
        %v1627 = vmul.f32 %v1599, %v790
        %v1628 = vmul.f32 %v1601, %v790
        %v1629 = vmul.f32 %v1603, %v790
        %v1630 = vmul.f32 %v1605, %v790
        %v1631 = vmul.f32 %v1607, %v790
        %v1632 = vmul.f32 %v1609, %v790
        %v1633 = vmul.f32 %v1611, %v790
        %v1634 = vmul.f32 %v1613, %v790
        %v1635 = vmul.f32 %v1615, %v790
        %v1636 = vmul.f32 %v1617, %v790
        %v1637 = vmul.f32 %v1619, %v790
        %v1638 = vmul.f32 %v1621, %v790
        %v1639 = vmul.f32 %v1623, %v790
        %v1640 = vmul.f32 %v1551, %v1551
        %v1641 = vmul.f32 %v1553, %v1553
        %v1642 = vmul.f32 %v1556, %v1556
        %v1643 = vmul.f32 %v1558, %v1558
        %v1644 = vmul.f32 %v1561, %v1561
        %v1645 = vmul.f32 %v1563, %v1563
        %v1646 = vmul.f32 %v1566, %v1566
        %v1647 = vmul.f32 %v1568, %v1568
        %v1648 = vmul.f32 %v1571, %v1571
        %v1649 = vmul.f32 %v1573, %v1573
        %v1650 = vmul.f32 %v1576, %v1576
        %v1651 = vmul.f32 %v1578, %v1578
        %v1652 = vmul.f32 %v1581, %v1581
        %v1653 = vmul.f32 %v1583, %v1583
        %v1654 = vmul.f32 %v1586, %v1586
        %v1655 = vmul.f32 %v1588, %v1588
        %1656 = vadd.xlane.f32.xlu0 %v1640
        %v1657 = vpop.xlane.xlu0 %1656
        %1658 = vadd.xlane.f32.xlu0 %v1641
        %v1659 = vpop.xlane.xlu0 %1658
        %1660 = vadd.xlane.f32.xlu0 %v1642
        %v1661 = vpop.xlane.xlu0 %1660
        %1662 = vadd.xlane.f32.xlu0 %v1643
        %v1663 = vpop.xlane.xlu0 %1662
        %1664 = vadd.xlane.f32.xlu0 %v1644
        %v1665 = vpop.xlane.xlu0 %1664
        %1666 = vadd.xlane.f32.xlu0 %v1645
        %v1667 = vpop.xlane.xlu0 %1666
        %1668 = vadd.xlane.f32.xlu0 %v1646
        %v1669 = vpop.xlane.xlu0 %1668
        %1670 = vadd.xlane.f32.xlu0 %v1647
        %v1671 = vpop.xlane.xlu0 %1670
        %1672 = vadd.xlane.f32.xlu0 %v1648
        %v1673 = vpop.xlane.xlu0 %1672
        %1674 = vadd.xlane.f32.xlu0 %v1649
        %v1675 = vpop.xlane.xlu0 %1674
        %1676 = vadd.xlane.f32.xlu0 %v1650
        %v1677 = vpop.xlane.xlu0 %1676
        %1678 = vadd.xlane.f32.xlu0 %v1651
        %v1679 = vpop.xlane.xlu0 %1678
        %1680 = vadd.xlane.f32.xlu0 %v1652
        %v1681 = vpop.xlane.xlu0 %1680
        %1682 = vadd.xlane.f32.xlu0 %v1653
        %v1683 = vpop.xlane.xlu0 %1682
        %1684 = vadd.xlane.f32.xlu0 %v1654
        %v1685 = vpop.xlane.xlu0 %1684
        %1686 = vadd.xlane.f32.xlu0 %v1655
        %v1687 = vpop.xlane.xlu0 %1686
        %v1688 = vmul.f32 %v1657, %v790
        %v1689 = vmul.f32 %v1659, %v790
        %v1690 = vmul.f32 %v1661, %v790
        %v1691 = vmul.f32 %v1663, %v790
        %v1692 = vmul.f32 %v1665, %v790
        %v1693 = vmul.f32 %v1667, %v790
        %v1694 = vmul.f32 %v1669, %v790
        %v1695 = vmul.f32 %v1671, %v790
        %v1696 = vmul.f32 %v1673, %v790
        %v1697 = vmul.f32 %v1675, %v790
        %v1698 = vmul.f32 %v1677, %v790
        %v1699 = vmul.f32 %v1679, %v790
        %v1700 = vmul.f32 %v1681, %v790
        %v1701 = vmul.f32 %v1683, %v790
        %v1702 = vmul.f32 %v1685, %v790
        %v1703 = vmul.f32 %v1687, %v790
        %v1704 = vmul.f32 %v1624, %v1624
        %v1705 = vmul.f32 %v1625, %v1625
        %v1706 = vmul.f32 %v1626, %v1626
        %v1707 = vmul.f32 %v1627, %v1627
        %v1708 = vmul.f32 %v1628, %v1628
        %v1709 = vmul.f32 %v1629, %v1629
        %v1710 = vmul.f32 %v1630, %v1630
        %v1711 = vmul.f32 %v1631, %v1631
        %v1712 = vmul.f32 %v1632, %v1632
        %v1713 = vmul.f32 %v1633, %v1633
        %v1714 = vmul.f32 %v1634, %v1634
        %v1715 = vmul.f32 %v1635, %v1635
        %v1716 = vmul.f32 %v1636, %v1636
        %v1717 = vmul.f32 %v1637, %v1637
        %v1718 = vmul.f32 %v1638, %v1638
        %v1719 = vmul.f32 %v1639, %v1639
        %v1720 = vsub.f32 %v1688, %v1704
        %v1721 = vsub.f32 %v1689, %v1705
        %v1722 = vsub.f32 %v1690, %v1706
        %v1723 = vsub.f32 %v1691, %v1707
        %v1724 = vsub.f32 %v1692, %v1708
        %v1725 = vsub.f32 %v1693, %v1709
        %v1726 = vsub.f32 %v1694, %v1710
        %v1727 = vsub.f32 %v1695, %v1711
        %v1728 = vsub.f32 %v1696, %v1712
        %v1729 = vsub.f32 %v1697, %v1713
        %v1730 = vsub.f32 %v1698, %v1714
        %v1731 = vsub.f32 %v1699, %v1715
        %v1732 = vsub.f32 %v1700, %v1716
        %v1733 = vsub.f32 %v1701, %v1717
        %v1734 = vsub.f32 %v1702, %v1718
        %v1735 = vsub.f32 %v1703, %v1719
        %v1736 = vsub.f32 %v1551, %v1624
        %v1737 = vsub.f32 %v1553, %v1625
        %v1738 = vsub.f32 %v1556, %v1626
        %v1739 = vsub.f32 %v1558, %v1627
        %v1740 = vsub.f32 %v1561, %v1628
        %v1741 = vsub.f32 %v1563, %v1629
        %v1742 = vsub.f32 %v1566, %v1630
        %v1743 = vsub.f32 %v1568, %v1631
        %v1744 = vsub.f32 %v1571, %v1632
        %v1745 = vsub.f32 %v1573, %v1633
        %v1746 = vsub.f32 %v1576, %v1634
        %v1747 = vsub.f32 %v1578, %v1635
        %v1748 = vsub.f32 %v1581, %v1636
        %v1749 = vsub.f32 %v1583, %v1637
        %v1750 = vsub.f32 %v1586, %v1638
        %v1751 = vsub.f32 %v1588, %v1639
        %v1752 = vadd.f32 %v1720, 1e-05
        %v1753 = vadd.f32 %v1721, 1e-05
        %v1754 = vadd.f32 %v1722, 1e-05
        %v1755 = vadd.f32 %v1723, 1e-05
        %v1756 = vadd.f32 %v1724, 1e-05
        %v1757 = vadd.f32 %v1725, 1e-05
        %v1758 = vadd.f32 %v1726, 1e-05
        %v1759 = vadd.f32 %v1727, 1e-05
        %v1760 = vadd.f32 %v1728, 1e-05
        %v1761 = vadd.f32 %v1729, 1e-05
        %v1762 = vadd.f32 %v1730, 1e-05
        %v1763 = vadd.f32 %v1731, 1e-05
        %v1764 = vadd.f32 %v1732, 1e-05
        %v1765 = vadd.f32 %v1733, 1e-05
        %v1766 = vadd.f32 %v1734, 1e-05
        %v1767 = vadd.f32 %v1735, 1e-05
        %v1768 = vrsqrt.pop %v1752
        %v1769 = vmul.f32 %v1768, %v1752
        %v1770 = vmul.f32 %v1769, %v1768
        %v1771 = vmul.f32 0.5, %v1770
        %v1772 = vsub.f32 1.5, %v1771
        %v1773 = vmul.f32 %v1768, %v1772
        %vm1774 = vweird.f32 %v1752
        %vm1775 = vweird.f32 %v1768
        %vm1776 = vmor %vm1774, %vm1775
        %v1777 = vsel %vm1776, %v1768, %v1773
        %v1778 = vrsqrt.pop %v1753
        %v1779 = vmul.f32 %v1778, %v1753
        %v1780 = vmul.f32 %v1779, %v1778
        %v1781 = vmul.f32 0.5, %v1780
        %v1782 = vsub.f32 1.5, %v1781
        %v1783 = vmul.f32 %v1778, %v1782
        %vm1784 = vweird.f32 %v1753
        %vm1785 = vweird.f32 %v1778
        %vm1786 = vmor %vm1784, %vm1785
        %v1787 = vsel %vm1786, %v1778, %v1783
        %v1788 = vrsqrt.pop %v1754
        %v1789 = vmul.f32 %v1788, %v1754
        %v1790 = vmul.f32 %v1789, %v1788
        %v1791 = vmul.f32 0.5, %v1790
        %v1792 = vsub.f32 1.5, %v1791
        %v1793 = vmul.f32 %v1788, %v1792
        %vm1794 = vweird.f32 %v1754
        %vm1795 = vweird.f32 %v1788
        %vm1796 = vmor %vm1794, %vm1795
        %v1797 = vsel %vm1796, %v1788, %v1793
        %v1798 = vrsqrt.pop %v1755
        %v1799 = vmul.f32 %v1798, %v1755
        %v1800 = vmul.f32 %v1799, %v1798
        %v1801 = vmul.f32 0.5, %v1800
        %v1802 = vsub.f32 1.5, %v1801
        %v1803 = vmul.f32 %v1798, %v1802
        %vm1804 = vweird.f32 %v1755
        %vm1805 = vweird.f32 %v1798
        %vm1806 = vmor %vm1804, %vm1805
        %v1807 = vsel %vm1806, %v1798, %v1803
        %v1808 = vrsqrt.pop %v1756
        %v1809 = vmul.f32 %v1808, %v1756
        %v1810 = vmul.f32 %v1809, %v1808
        %v1811 = vmul.f32 0.5, %v1810
        %v1812 = vsub.f32 1.5, %v1811
        %v1813 = vmul.f32 %v1808, %v1812
        %vm1814 = vweird.f32 %v1756
        %vm1815 = vweird.f32 %v1808
        %vm1816 = vmor %vm1814, %vm1815
        %v1817 = vsel %vm1816, %v1808, %v1813
        %v1818 = vrsqrt.pop %v1757
        %v1819 = vmul.f32 %v1818, %v1757
        %v1820 = vmul.f32 %v1819, %v1818
        %v1821 = vmul.f32 0.5, %v1820
        %v1822 = vsub.f32 1.5, %v1821
        %v1823 = vmul.f32 %v1818, %v1822
        %vm1824 = vweird.f32 %v1757
        %vm1825 = vweird.f32 %v1818
        %vm1826 = vmor %vm1824, %vm1825
        %v1827 = vsel %vm1826, %v1818, %v1823
        %v1828 = vrsqrt.pop %v1758
        %v1829 = vmul.f32 %v1828, %v1758
        %v1830 = vmul.f32 %v1829, %v1828
        %v1831 = vmul.f32 0.5, %v1830
        %v1832 = vsub.f32 1.5, %v1831
        %v1833 = vmul.f32 %v1828, %v1832
        %vm1834 = vweird.f32 %v1758
        %vm1835 = vweird.f32 %v1828
        %vm1836 = vmor %vm1834, %vm1835
        %v1837 = vsel %vm1836, %v1828, %v1833
        %v1838 = vrsqrt.pop %v1759
        %v1839 = vmul.f32 %v1838, %v1759
        %v1840 = vmul.f32 %v1839, %v1838
        %v1841 = vmul.f32 0.5, %v1840
        %v1842 = vsub.f32 1.5, %v1841
        %v1843 = vmul.f32 %v1838, %v1842
        %vm1844 = vweird.f32 %v1759
        %vm1845 = vweird.f32 %v1838
        %vm1846 = vmor %vm1844, %vm1845
        %v1847 = vsel %vm1846, %v1838, %v1843
        %v1848 = vrsqrt.pop %v1760
        %v1849 = vmul.f32 %v1848, %v1760
        %v1850 = vmul.f32 %v1849, %v1848
        %v1851 = vmul.f32 0.5, %v1850
        %v1852 = vsub.f32 1.5, %v1851
        %v1853 = vmul.f32 %v1848, %v1852
        %vm1854 = vweird.f32 %v1760
        %vm1855 = vweird.f32 %v1848
        %vm1856 = vmor %vm1854, %vm1855
        %v1857 = vsel %vm1856, %v1848, %v1853
        %v1858 = vrsqrt.pop %v1761
        %v1859 = vmul.f32 %v1858, %v1761
        %v1860 = vmul.f32 %v1859, %v1858
        %v1861 = vmul.f32 0.5, %v1860
        %v1862 = vsub.f32 1.5, %v1861
        %v1863 = vmul.f32 %v1858, %v1862
        %vm1864 = vweird.f32 %v1761
        %vm1865 = vweird.f32 %v1858
        %vm1866 = vmor %vm1864, %vm1865
        %v1867 = vsel %vm1866, %v1858, %v1863
        %v1868 = vrsqrt.pop %v1762
        %v1869 = vmul.f32 %v1868, %v1762
        %v1870 = vmul.f32 %v1869, %v1868
        %v1871 = vmul.f32 0.5, %v1870
        %v1872 = vsub.f32 1.5, %v1871
        %v1873 = vmul.f32 %v1868, %v1872
        %vm1874 = vweird.f32 %v1762
        %vm1875 = vweird.f32 %v1868
        %vm1876 = vmor %vm1874, %vm1875
        %v1877 = vsel %vm1876, %v1868, %v1873
        %v1878 = vrsqrt.pop %v1763
        %v1879 = vmul.f32 %v1878, %v1763
        %v1880 = vmul.f32 %v1879, %v1878
        %v1881 = vmul.f32 0.5, %v1880
        %v1882 = vsub.f32 1.5, %v1881
        %v1883 = vmul.f32 %v1878, %v1882
        %vm1884 = vweird.f32 %v1763
        %vm1885 = vweird.f32 %v1878
        %vm1886 = vmor %vm1884, %vm1885
        %v1887 = vsel %vm1886, %v1878, %v1883
        %v1888 = vrsqrt.pop %v1764
        %v1889 = vmul.f32 %v1888, %v1764
        %v1890 = vmul.f32 %v1889, %v1888
        %v1891 = vmul.f32 0.5, %v1890
        %v1892 = vsub.f32 1.5, %v1891
        %v1893 = vmul.f32 %v1888, %v1892
        %vm1894 = vweird.f32 %v1764
        %vm1895 = vweird.f32 %v1888
        %vm1896 = vmor %vm1894, %vm1895
        %v1897 = vsel %vm1896, %v1888, %v1893
        %v1898 = vrsqrt.pop %v1765
        %v1899 = vmul.f32 %v1898, %v1765
        %v1900 = vmul.f32 %v1899, %v1898
        %v1901 = vmul.f32 0.5, %v1900
        %v1902 = vsub.f32 1.5, %v1901
        %v1903 = vmul.f32 %v1898, %v1902
        %vm1904 = vweird.f32 %v1765
        %vm1905 = vweird.f32 %v1898
        %vm1906 = vmor %vm1904, %vm1905
        %v1907 = vsel %vm1906, %v1898, %v1903
        %v1908 = vrsqrt.pop %v1766
        %v1909 = vmul.f32 %v1908, %v1766
        %v1910 = vmul.f32 %v1909, %v1908
        %v1911 = vmul.f32 0.5, %v1910
        %v1912 = vsub.f32 1.5, %v1911
        %v1913 = vmul.f32 %v1908, %v1912
        %vm1914 = vweird.f32 %v1766
        %vm1915 = vweird.f32 %v1908
        %vm1916 = vmor %vm1914, %vm1915
        %v1917 = vsel %vm1916, %v1908, %v1913
        %v1918 = vrsqrt.pop %v1767
        %v1919 = vmul.f32 %v1918, %v1767
        %v1920 = vmul.f32 %v1919, %v1918
        %v1921 = vmul.f32 0.5, %v1920
        %v1922 = vsub.f32 1.5, %v1921
        %v1923 = vmul.f32 %v1918, %v1922
        %vm1924 = vweird.f32 %v1767
        %vm1925 = vweird.f32 %v1918
        %vm1926 = vmor %vm1924, %vm1925
        %v1927 = vsel %vm1926, %v1918, %v1923
        %v1928 = vmul.f32 %v1736, %v1777
        %v1929 = vmul.f32 %v1737, %v1787
        %v1930 = vmul.f32 %v1738, %v1797
        %v1931 = vmul.f32 %v1739, %v1807
        %v1932 = vmul.f32 %v1740, %v1817
        %v1933 = vmul.f32 %v1741, %v1827
        %v1934 = vmul.f32 %v1742, %v1837
        %v1935 = vmul.f32 %v1743, %v1847
        %v1936 = vmul.f32 %v1744, %v1857
        %v1937 = vmul.f32 %v1745, %v1867
        %v1938 = vmul.f32 %v1746, %v1877
        %v1939 = vmul.f32 %v1747, %v1887
        %v1940 = vmul.f32 %v1748, %v1897
        %v1941 = vmul.f32 %v1749, %v1907
        %v1942 = vmul.f32 %v1750, %v1917
        %v1943 = vmul.f32 %v1751, %v1927
        %v1945 = vperm.slane %v1590, 0
        %v1947 = vmul.f32 %v1928, %v1945
        %v1948 = vmul.f32 %v1929, %v1945
        %v1949 = vmul.f32 %v1930, %v1945
        %v1950 = vmul.f32 %v1931, %v1945
        %v1951 = vmul.f32 %v1932, %v1945
        %v1952 = vmul.f32 %v1933, %v1945
        %v1953 = vmul.f32 %v1934, %v1945
        %v1954 = vmul.f32 %v1935, %v1945
        %v1955 = vmul.f32 %v1936, %v1945
        %v1956 = vmul.f32 %v1937, %v1945
        %v1957 = vmul.f32 %v1938, %v1945
        %v1958 = vmul.f32 %v1939, %v1945
        %v1959 = vmul.f32 %v1940, %v1945
        %v1960 = vmul.f32 %v1941, %v1945
        %v1961 = vmul.f32 %v1942, %v1945
        %v1962 = vmul.f32 %v1943, %v1945
        %v1964 = vperm.slane %v1591, 0
        %v1966 = vadd.f32 %v1947, %v1964
        %v1967 = vadd.f32 %v1948, %v1964
        %v1968 = vadd.f32 %v1949, %v1964
        %v1969 = vadd.f32 %v1950, %v1964
        %v1970 = vadd.f32 %v1951, %v1964
        %v1971 = vadd.f32 %v1952, %v1964
        %v1972 = vadd.f32 %v1953, %v1964
        %v1973 = vadd.f32 %v1954, %v1964
        %v1974 = vadd.f32 %v1955, %v1964
        %v1975 = vadd.f32 %v1956, %v1964
        %v1976 = vadd.f32 %v1957, %v1964
        %v1977 = vadd.f32 %v1958, %v1964
        %v1978 = vadd.f32 %v1959, %v1964
        %v1979 = vadd.f32 %v1960, %v1964
        %v1980 = vadd.f32 %v1961, %v1964
        %v1981 = vadd.f32 %v1962, %v1964
        %v1982 = vxor.u32 %v1966, 2147483648
        %v1983 = vxor.u32 %v1967, 2147483648
        %v1984 = vxor.u32 %v1968, 2147483648
        %v1985 = vxor.u32 %v1969, 2147483648
        %v1986 = vxor.u32 %v1970, 2147483648
        %v1987 = vxor.u32 %v1971, 2147483648
        %v1988 = vxor.u32 %v1972, 2147483648
        %v1989 = vxor.u32 %v1973, 2147483648
        %v1990 = vxor.u32 %v1974, 2147483648
        %v1991 = vxor.u32 %v1975, 2147483648
        %v1992 = vxor.u32 %v1976, 2147483648
        %v1993 = vxor.u32 %v1977, 2147483648
        %v1994 = vxor.u32 %v1978, 2147483648
        %v1995 = vxor.u32 %v1979, 2147483648
        %v1996 = vxor.u32 %v1980, 2147483648
        %v1997 = vxor.u32 %v1981, 2147483648
        %v1998 = vmul.f32 %v1982, 1.442695
        %v1999 = vpow.pop %v1998
        %v2000 = vmul.f32 %v1983, 1.442695
        %v2001 = vpow.pop %v2000
        %v2002 = vmul.f32 %v1984, 1.442695
        %v2003 = vpow.pop %v2002
        %v2004 = vmul.f32 %v1985, 1.442695
        %v2005 = vpow.pop %v2004
        %v2006 = vmul.f32 %v1986, 1.442695
        %v2007 = vpow.pop %v2006
        %v2008 = vmul.f32 %v1987, 1.442695
        %v2009 = vpow.pop %v2008
        %v2010 = vmul.f32 %v1988, 1.442695
        %v2011 = vpow.pop %v2010
        %v2012 = vmul.f32 %v1989, 1.442695
        %v2013 = vpow.pop %v2012
        %v2014 = vmul.f32 %v1990, 1.442695
        %v2015 = vpow.pop %v2014
        %v2016 = vmul.f32 %v1991, 1.442695
        %v2017 = vpow.pop %v2016
        %v2018 = vmul.f32 %v1992, 1.442695
        %v2019 = vpow.pop %v2018
        %v2020 = vmul.f32 %v1993, 1.442695
        %v2021 = vpow.pop %v2020
        %v2022 = vmul.f32 %v1994, 1.442695
        %v2023 = vpow.pop %v2022
        %v2024 = vmul.f32 %v1995, 1.442695
        %v2025 = vpow.pop %v2024
        %v2026 = vmul.f32 %v1996, 1.442695
        %v2027 = vpow.pop %v2026
        %v2028 = vmul.f32 %v1997, 1.442695
        %v2029 = vpow.pop %v2028
        %v2030 = vadd.f32 %v1999, 1.0
        %v2031 = vadd.f32 %v2001, 1.0
        %v2032 = vadd.f32 %v2003, 1.0
        %v2033 = vadd.f32 %v2005, 1.0
        %v2034 = vadd.f32 %v2007, 1.0
        %v2035 = vadd.f32 %v2009, 1.0
        %v2036 = vadd.f32 %v2011, 1.0
        %v2037 = vadd.f32 %v2013, 1.0
        %v2038 = vadd.f32 %v2015, 1.0
        %v2039 = vadd.f32 %v2017, 1.0
        %v2040 = vadd.f32 %v2019, 1.0
        %v2041 = vadd.f32 %v2021, 1.0
        %v2042 = vadd.f32 %v2023, 1.0
        %v2043 = vadd.f32 %v2025, 1.0
        %v2044 = vadd.f32 %v2027, 1.0
        %v2045 = vadd.f32 %v2029, 1.0
        %v2046 = vrcp.pop %v2030
        %v2047 = vmul.f32 %v2030, %v2046
        %v2048 = vsub.f32 1.0, %v2047
        %v2049 = vmul.f32 %v2046, %v2048
        %v2050 = vadd.f32 %v2046, %v2049
        %vm2051 = vweird.f32 %v2030
        %vm2052 = vweird.f32 %v2046
        %vm2053 = vmor %vm2051, %vm2052
        %v2054 = vsel %vm2053, %v2046, %v2050
        %v2055 = vand.u32 2147483647, %v2030
        %vm2056 = vcmp.eq.f32.partialorder %v2055, 8.507059e+37
        %v2057 = vand.u32 %v2030, 2147483648
        %v2058 = vor.u32 1.1754944e-38, %v2057
        %v2059 = vsel %vm2056, %v2058, %v2054
        %v2060 = vmul.f32 1.0, %v2059
        %v2061 = vrcp.pop %v2031
        %v2062 = vmul.f32 %v2031, %v2061
        %v2063 = vsub.f32 1.0, %v2062
        %v2064 = vmul.f32 %v2061, %v2063
        %v2065 = vadd.f32 %v2061, %v2064
        %vm2066 = vweird.f32 %v2031
        %vm2067 = vweird.f32 %v2061
        %vm2068 = vmor %vm2066, %vm2067
        %v2069 = vsel %vm2068, %v2061, %v2065
        %v2070 = vand.u32 2147483647, %v2031
        %vm2071 = vcmp.eq.f32.partialorder %v2070, 8.507059e+37
        %v2072 = vand.u32 %v2031, 2147483648
        %v2073 = vor.u32 1.1754944e-38, %v2072
        %v2074 = vsel %vm2071, %v2073, %v2069
        %v2075 = vmul.f32 1.0, %v2074
        %v2076 = vrcp.pop %v2032
        %v2077 = vmul.f32 %v2032, %v2076
        %v2078 = vsub.f32 1.0, %v2077
        %v2079 = vmul.f32 %v2076, %v2078
        %v2080 = vadd.f32 %v2076, %v2079
        %vm2081 = vweird.f32 %v2032
        %vm2082 = vweird.f32 %v2076
        %vm2083 = vmor %vm2081, %vm2082
        %v2084 = vsel %vm2083, %v2076, %v2080
        %v2085 = vand.u32 2147483647, %v2032
        %vm2086 = vcmp.eq.f32.partialorder %v2085, 8.507059e+37
        %v2087 = vand.u32 %v2032, 2147483648
        %v2088 = vor.u32 1.1754944e-38, %v2087
        %v2089 = vsel %vm2086, %v2088, %v2084
        %v2090 = vmul.f32 1.0, %v2089
        %v2091 = vrcp.pop %v2033
        %v2092 = vmul.f32 %v2033, %v2091
        %v2093 = vsub.f32 1.0, %v2092
        %v2094 = vmul.f32 %v2091, %v2093
        %v2095 = vadd.f32 %v2091, %v2094
        %vm2096 = vweird.f32 %v2033
        %vm2097 = vweird.f32 %v2091
        %vm2098 = vmor %vm2096, %vm2097
        %v2099 = vsel %vm2098, %v2091, %v2095
        %v2100 = vand.u32 2147483647, %v2033
        %vm2101 = vcmp.eq.f32.partialorder %v2100, 8.507059e+37
        %v2102 = vand.u32 %v2033, 2147483648
        %v2103 = vor.u32 1.1754944e-38, %v2102
        %v2104 = vsel %vm2101, %v2103, %v2099
        %v2105 = vmul.f32 1.0, %v2104
        %v2106 = vrcp.pop %v2034
        %v2107 = vmul.f32 %v2034, %v2106
        %v2108 = vsub.f32 1.0, %v2107
        %v2109 = vmul.f32 %v2106, %v2108
        %v2110 = vadd.f32 %v2106, %v2109
        %vm2111 = vweird.f32 %v2034
        %vm2112 = vweird.f32 %v2106
        %vm2113 = vmor %vm2111, %vm2112
        %v2114 = vsel %vm2113, %v2106, %v2110
        %v2115 = vand.u32 2147483647, %v2034
        %vm2116 = vcmp.eq.f32.partialorder %v2115, 8.507059e+37
        %v2117 = vand.u32 %v2034, 2147483648
        %v2118 = vor.u32 1.1754944e-38, %v2117
        %v2119 = vsel %vm2116, %v2118, %v2114
        %v2120 = vmul.f32 1.0, %v2119
        %v2121 = vrcp.pop %v2035
        %v2122 = vmul.f32 %v2035, %v2121
        %v2123 = vsub.f32 1.0, %v2122
        %v2124 = vmul.f32 %v2121, %v2123
        %v2125 = vadd.f32 %v2121, %v2124
        %vm2126 = vweird.f32 %v2035
        %vm2127 = vweird.f32 %v2121
        %vm2128 = vmor %vm2126, %vm2127
        %v2129 = vsel %vm2128, %v2121, %v2125
        %v2130 = vand.u32 2147483647, %v2035
        %vm2131 = vcmp.eq.f32.partialorder %v2130, 8.507059e+37
        %v2132 = vand.u32 %v2035, 2147483648
        %v2133 = vor.u32 1.1754944e-38, %v2132
        %v2134 = vsel %vm2131, %v2133, %v2129
        %v2135 = vmul.f32 1.0, %v2134
        %v2136 = vrcp.pop %v2036
        %v2137 = vmul.f32 %v2036, %v2136
        %v2138 = vsub.f32 1.0, %v2137
        %v2139 = vmul.f32 %v2136, %v2138
        %v2140 = vadd.f32 %v2136, %v2139
        %vm2141 = vweird.f32 %v2036
        %vm2142 = vweird.f32 %v2136
        %vm2143 = vmor %vm2141, %vm2142
        %v2144 = vsel %vm2143, %v2136, %v2140
        %v2145 = vand.u32 2147483647, %v2036
        %vm2146 = vcmp.eq.f32.partialorder %v2145, 8.507059e+37
        %v2147 = vand.u32 %v2036, 2147483648
        %v2148 = vor.u32 1.1754944e-38, %v2147
        %v2149 = vsel %vm2146, %v2148, %v2144
        %v2150 = vmul.f32 1.0, %v2149
        %v2151 = vrcp.pop %v2037
        %v2152 = vmul.f32 %v2037, %v2151
        %v2153 = vsub.f32 1.0, %v2152
        %v2154 = vmul.f32 %v2151, %v2153
        %v2155 = vadd.f32 %v2151, %v2154
        %vm2156 = vweird.f32 %v2037
        %vm2157 = vweird.f32 %v2151
        %vm2158 = vmor %vm2156, %vm2157
        %v2159 = vsel %vm2158, %v2151, %v2155
        %v2160 = vand.u32 2147483647, %v2037
        %vm2161 = vcmp.eq.f32.partialorder %v2160, 8.507059e+37
        %v2162 = vand.u32 %v2037, 2147483648
        %v2163 = vor.u32 1.1754944e-38, %v2162
        %v2164 = vsel %vm2161, %v2163, %v2159
        %v2165 = vmul.f32 1.0, %v2164
        %v2166 = vrcp.pop %v2038
        %v2167 = vmul.f32 %v2038, %v2166
        %v2168 = vsub.f32 1.0, %v2167
        %v2169 = vmul.f32 %v2166, %v2168
        %v2170 = vadd.f32 %v2166, %v2169
        %vm2171 = vweird.f32 %v2038
        %vm2172 = vweird.f32 %v2166
        %vm2173 = vmor %vm2171, %vm2172
        %v2174 = vsel %vm2173, %v2166, %v2170
        %v2175 = vand.u32 2147483647, %v2038
        %vm2176 = vcmp.eq.f32.partialorder %v2175, 8.507059e+37
        %v2177 = vand.u32 %v2038, 2147483648
        %v2178 = vor.u32 1.1754944e-38, %v2177
        %v2179 = vsel %vm2176, %v2178, %v2174
        %v2180 = vmul.f32 1.0, %v2179
        %v2181 = vrcp.pop %v2039
        %v2182 = vmul.f32 %v2039, %v2181
        %v2183 = vsub.f32 1.0, %v2182
        %v2184 = vmul.f32 %v2181, %v2183
        %v2185 = vadd.f32 %v2181, %v2184
        %vm2186 = vweird.f32 %v2039
        %vm2187 = vweird.f32 %v2181
        %vm2188 = vmor %vm2186, %vm2187
        %v2189 = vsel %vm2188, %v2181, %v2185
        %v2190 = vand.u32 2147483647, %v2039
        %vm2191 = vcmp.eq.f32.partialorder %v2190, 8.507059e+37
        %v2192 = vand.u32 %v2039, 2147483648
        %v2193 = vor.u32 1.1754944e-38, %v2192
        %v2194 = vsel %vm2191, %v2193, %v2189
        %v2195 = vmul.f32 1.0, %v2194
        %v2196 = vrcp.pop %v2040
        %v2197 = vmul.f32 %v2040, %v2196
        %v2198 = vsub.f32 1.0, %v2197
        %v2199 = vmul.f32 %v2196, %v2198
        %v2200 = vadd.f32 %v2196, %v2199
        %vm2201 = vweird.f32 %v2040
        %vm2202 = vweird.f32 %v2196
        %vm2203 = vmor %vm2201, %vm2202
        %v2204 = vsel %vm2203, %v2196, %v2200
        %v2205 = vand.u32 2147483647, %v2040
        %vm2206 = vcmp.eq.f32.partialorder %v2205, 8.507059e+37
        %v2207 = vand.u32 %v2040, 2147483648
        %v2208 = vor.u32 1.1754944e-38, %v2207
        %v2209 = vsel %vm2206, %v2208, %v2204
        %v2210 = vmul.f32 1.0, %v2209
        %v2211 = vrcp.pop %v2041
        %v2212 = vmul.f32 %v2041, %v2211
        %v2213 = vsub.f32 1.0, %v2212
        %v2214 = vmul.f32 %v2211, %v2213
        %v2215 = vadd.f32 %v2211, %v2214
        %vm2216 = vweird.f32 %v2041
        %vm2217 = vweird.f32 %v2211
        %vm2218 = vmor %vm2216, %vm2217
        %v2219 = vsel %vm2218, %v2211, %v2215
        %v2220 = vand.u32 2147483647, %v2041
        %vm2221 = vcmp.eq.f32.partialorder %v2220, 8.507059e+37
        %v2222 = vand.u32 %v2041, 2147483648
        %v2223 = vor.u32 1.1754944e-38, %v2222
        %v2224 = vsel %vm2221, %v2223, %v2219
        %v2225 = vmul.f32 1.0, %v2224
        %v2226 = vrcp.pop %v2042
        %v2227 = vmul.f32 %v2042, %v2226
        %v2228 = vsub.f32 1.0, %v2227
        %v2229 = vmul.f32 %v2226, %v2228
        %v2230 = vadd.f32 %v2226, %v2229
        %vm2231 = vweird.f32 %v2042
        %vm2232 = vweird.f32 %v2226
        %vm2233 = vmor %vm2231, %vm2232
        %v2234 = vsel %vm2233, %v2226, %v2230
        %v2235 = vand.u32 2147483647, %v2042
        %vm2236 = vcmp.eq.f32.partialorder %v2235, 8.507059e+37
        %v2237 = vand.u32 %v2042, 2147483648
        %v2238 = vor.u32 1.1754944e-38, %v2237
        %v2239 = vsel %vm2236, %v2238, %v2234
        %v2240 = vmul.f32 1.0, %v2239
        %v2241 = vrcp.pop %v2043
        %v2242 = vmul.f32 %v2043, %v2241
        %v2243 = vsub.f32 1.0, %v2242
        %v2244 = vmul.f32 %v2241, %v2243
        %v2245 = vadd.f32 %v2241, %v2244
        %vm2246 = vweird.f32 %v2043
        %vm2247 = vweird.f32 %v2241
        %vm2248 = vmor %vm2246, %vm2247
        %v2249 = vsel %vm2248, %v2241, %v2245
        %v2250 = vand.u32 2147483647, %v2043
        %vm2251 = vcmp.eq.f32.partialorder %v2250, 8.507059e+37
        %v2252 = vand.u32 %v2043, 2147483648
        %v2253 = vor.u32 1.1754944e-38, %v2252
        %v2254 = vsel %vm2251, %v2253, %v2249
        %v2255 = vmul.f32 1.0, %v2254
        %v2256 = vrcp.pop %v2044
        %v2257 = vmul.f32 %v2044, %v2256
        %v2258 = vsub.f32 1.0, %v2257
        %v2259 = vmul.f32 %v2256, %v2258
        %v2260 = vadd.f32 %v2256, %v2259
        %vm2261 = vweird.f32 %v2044
        %vm2262 = vweird.f32 %v2256
        %vm2263 = vmor %vm2261, %vm2262
        %v2264 = vsel %vm2263, %v2256, %v2260
        %v2265 = vand.u32 2147483647, %v2044
        %vm2266 = vcmp.eq.f32.partialorder %v2265, 8.507059e+37
        %v2267 = vand.u32 %v2044, 2147483648
        %v2268 = vor.u32 1.1754944e-38, %v2267
        %v2269 = vsel %vm2266, %v2268, %v2264
        %v2270 = vmul.f32 1.0, %v2269
        %v2271 = vrcp.pop %v2045
        %v2272 = vmul.f32 %v2045, %v2271
        %v2273 = vsub.f32 1.0, %v2272
        %v2274 = vmul.f32 %v2271, %v2273
        %v2275 = vadd.f32 %v2271, %v2274
        %vm2276 = vweird.f32 %v2045
        %vm2277 = vweird.f32 %v2271
        %vm2278 = vmor %vm2276, %vm2277
        %v2279 = vsel %vm2278, %v2271, %v2275
        %v2280 = vand.u32 2147483647, %v2045
        %vm2281 = vcmp.eq.f32.partialorder %v2280, 8.507059e+37
        %v2282 = vand.u32 %v2045, 2147483648
        %v2283 = vor.u32 1.1754944e-38, %v2282
        %v2284 = vsel %vm2281, %v2283, %v2279
        %v2285 = vmul.f32 1.0, %v2284
        %v2286 = vmul.f32 %v1966, %v2060
        %v2287 = vmul.f32 %v1967, %v2075
        %v2288 = vmul.f32 %v1968, %v2090
        %v2289 = vmul.f32 %v1969, %v2105
        %v2290 = vmul.f32 %v1970, %v2120
        %v2291 = vmul.f32 %v1971, %v2135
        %v2292 = vmul.f32 %v1972, %v2150
        %v2293 = vmul.f32 %v1973, %v2165
        %v2294 = vmul.f32 %v1974, %v2180
        %v2295 = vmul.f32 %v1975, %v2195
        %v2296 = vmul.f32 %v1976, %v2210
        %v2297 = vmul.f32 %v1977, %v2225
        %v2298 = vmul.f32 %v1978, %v2240
        %v2299 = vmul.f32 %v1979, %v2255
        %v2300 = vmul.f32 %v1980, %v2270
        %v2301 = vmul.f32 %v1981, %v2285
        %v2302 = vld [vmem:[%s9] sm:$0x1]
        %v2304 = vperm.slane %v2302, 0
        %v2306 = vmul.f32 %v2286, %v2304
        %v2307 = vmul.f32 %v2287, %v2304
        %v2308 = vmul.f32 %v2288, %v2304
        %v2309 = vmul.f32 %v2289, %v2304
        %v2310 = vmul.f32 %v2290, %v2304
        %v2311 = vmul.f32 %v2291, %v2304
        %v2312 = vmul.f32 %v2292, %v2304
        %v2313 = vmul.f32 %v2293, %v2304
        %v2314 = vmul.f32 %v2294, %v2304
        %v2315 = vmul.f32 %v2295, %v2304
        %v2316 = vmul.f32 %v2296, %v2304
        %v2317 = vmul.f32 %v2297, %v2304
        %v2318 = vmul.f32 %v2298, %v2304
        %v2319 = vmul.f32 %v2299, %v2304
        %v2320 = vmul.f32 %v2300, %v2304
        %v2321 = vmul.f32 %v2301, %v2304
        %2322 = vadd.xlane.f32.xlu0 %v2306
        %v2323 = vpop.xlane.xlu0 %2322
        %2324 = vadd.xlane.f32.xlu0 %v2307
        %v2325 = vpop.xlane.xlu0 %2324
        %2326 = vadd.xlane.f32.xlu0 %v2308
        %v2327 = vpop.xlane.xlu0 %2326
        %2328 = vadd.xlane.f32.xlu0 %v2309
        %v2329 = vpop.xlane.xlu0 %2328
        %2330 = vadd.xlane.f32.xlu0 %v2310
        %v2331 = vpop.xlane.xlu0 %2330
        %2332 = vadd.xlane.f32.xlu0 %v2311
        %v2333 = vpop.xlane.xlu0 %2332
        %2334 = vadd.xlane.f32.xlu0 %v2312
        %v2335 = vpop.xlane.xlu0 %2334
        %2336 = vadd.xlane.f32.xlu0 %v2313
        %v2337 = vpop.xlane.xlu0 %2336
        %2338 = vadd.xlane.f32.xlu0 %v2314
        %v2339 = vpop.xlane.xlu0 %2338
        %2340 = vadd.xlane.f32.xlu0 %v2315
        %v2341 = vpop.xlane.xlu0 %2340
        %2342 = vadd.xlane.f32.xlu0 %v2316
        %v2343 = vpop.xlane.xlu0 %2342
        %2344 = vadd.xlane.f32.xlu0 %v2317
        %v2345 = vpop.xlane.xlu0 %2344
        %2346 = vadd.xlane.f32.xlu0 %v2318
        %v2347 = vpop.xlane.xlu0 %2346
        %2348 = vadd.xlane.f32.xlu0 %v2319
        %v2349 = vpop.xlane.xlu0 %2348
        %2350 = vadd.xlane.f32.xlu0 %v2320
        %v2351 = vpop.xlane.xlu0 %2350
        %2352 = vadd.xlane.f32.xlu0 %v2321
        %v2353 = vpop.xlane.xlu0 %2352
        %vm2354 = vcmask 7168
        %2355 = vst.msk [vmem:[%s474] sm:$0xff] %vm2354, %v2323
        %2356 = vst.msk [vmem:[%s474 + $0x8] sm:$0xff] %vm2354, %v2325
        %2357 = vst.msk [vmem:[%s474 + $0x10] sm:$0xff] %vm2354, %v2327
        %2358 = vst.msk [vmem:[%s474 + $0x18] sm:$0xff] %vm2354, %v2329
        %2359 = vst.msk [vmem:[%s474 + $0x20] sm:$0xff] %vm2354, %v2331
        %2360 = vst.msk [vmem:[%s474 + $0x28] sm:$0xff] %vm2354, %v2333
        %2361 = vst.msk [vmem:[%s474 + $0x30] sm:$0xff] %vm2354, %v2335
        %2362 = vst.msk [vmem:[%s474 + $0x38] sm:$0xff] %vm2354, %v2337
        %2363 = vst.msk [vmem:[%s474 + $0x40] sm:$0xff] %vm2354, %v2339
        %2364 = vst.msk [vmem:[%s474 + $0x48] sm:$0xff] %vm2354, %v2341
        %2365 = vst.msk [vmem:[%s474 + $0x50] sm:$0xff] %vm2354, %v2343
        %2366 = vst.msk [vmem:[%s474 + $0x58] sm:$0xff] %vm2354, %v2345
        %2367 = vst.msk [vmem:[%s474 + $0x60] sm:$0xff] %vm2354, %v2347
        %2368 = vst.msk [vmem:[%s474 + $0x68] sm:$0xff] %vm2354, %v2349
        %2369 = vst.msk [vmem:[%s474 + $0x70] sm:$0xff] %vm2354, %v2351
        %2370 = vst.msk [vmem:[%s474 + $0x78] sm:$0xff] %vm2354, %v2353
        %s2371 = smul.u32 16, %s28
        %p2372 = scmp.lt.s32.totalorder %s2371, 31
        %s2373 = scalar_select %p2372, %s2371, 31
        %s2374 = smul.addr %s2373, 8
        %s2375 = scalar_lea.vmem %s10, %s2374
        // Predicated region
        $region81: #{tpu_custom_call.1} parent=59 // pred_check
          %p2376 = pneg %p266
        $region82: #{tpu_custom_call.1} parent=59 // pred_check_branch
          %2378 = sbr.rel (%p2376) target = $region84
        $region83: #{tpu_custom_call.1} parent=59 // pred_region
          %s2379 = smul.u32 16, %s28
        $region84: #{tpu_custom_call.1} parent=59 // pred_fallthru
          _
      $region60: #{tpu_custom_call.1} parent=5 // pred_fallthru
        _
      %p2380 = scmp.le.s32.totalorder 2, %s23
      // Predicated region
      $region85: #{tpu_custom_call.1} parent=5 // pred_check
        %p2381 = pneg %p2380
      $region86: #{tpu_custom_call.1} parent=5 // pred_check_branch
        %2383 = sbr.rel (%p2381) target = $region88
      $region87: #{tpu_custom_call.1} parent=5 // pred_region
        %s2384 = ssub.s32 %s23, 2
        // Predicated region
        $region89: #{tpu_custom_call.1} parent=87 // pred_check
          %p2385 = pneg %p272
        $region90: #{tpu_custom_call.1} parent=87 // pred_check_branch
          %2387 = sbr.rel (%p2385) target = $region92
        $region91: #{tpu_custom_call.1} parent=87 // pred_region
          %s2388 = smul.u32 16, %s29
          %p2389 = scmp.lt.s32.totalorder %s2388, 31
          %s2390 = scalar_select %p2389, %s2388, 31
          %s2391 = smul.addr %s2390, 8
          %s2392 = scalar_lea.vmem %s10, %s2391
        $region92: #{tpu_custom_call.1} parent=87 // pred_fallthru
          _
      $region88: #{tpu_custom_call.1} parent=5 // pred_fallthru
        _
    $region6: #{tpu_custom_call.1} parent=1 // loop_footer
      %s27 = sadd.s32 1, %s23
    $region7: #{tpu_custom_call.1} parent=1 // loop_footer_branch
      %22 = sbr.rel target = $region3
    $region8: #{tpu_custom_call.1} parent=1 // loop_exit
      _
    %2393 = vsyncpa [#allocation3], 1
    %s2394 = scalar_lea.sflag [#allocation3], 1
    %2395 = vsyncpa %s2394, 1
    %2396 = vsyncpa [#allocation5], 1
    %s2397 = scalar_lea.sflag [#allocation5], 1
    %2398 = vsyncpa %s2397, 1
    %2399 = vsyncpa [#allocation8], 1

</llo_original>
